<compile_context>
chip_gen: v7x
topology: tpu7x:2x2x1
jax: 0.10.0
libtpu: 0.0.40
codegen_flags: <defaults>
</compile_context>

<pallas_src>
import jax
import jax.numpy as jnp
from jax.experimental import pallas as pl
from jax.experimental.pallas import tpu as pltpu

MXU_DTYPE = jnp.bfloat16  # matmul operand dtype; accumulation is always f32


def _mm(a, b):
    """2-D MXU matmul with bf16 operands, f32 accumulation."""
    return jnp.dot(a.astype(MXU_DTYPE), b.astype(MXU_DTYPE),
                   preferred_element_type=jnp.float32)


def _mhp_fused_kernel(
        # per-batch blocks (leading batch dim squeezed away)
        vid_ref, aud_ref, tgt_ref,
        # grid-invariant weights (resident in VMEM, fetched once)
        wv_ref, wa_ref, bp_ref,
        wc_ref, bc_ref, we_edge_ref,
        winv_ref, weinv_ref,
        wm_ref, we_motor_ref, log_s_ref,
        # per-batch outputs
        speaker_ref, edge_ref, listener_ref, nearest_ref, logdet_ref):
    T = vid_ref.shape[0]
    K = tgt_ref.shape[0]
    D = speaker_ref.shape[1]

    # ---- perceptual processor: fused = video @ Wv + audio @ Wa + bp --------
    fused = (_mm(vid_ref[...], wv_ref[...])
             + _mm(aud_ref[...], wa_ref[...])
             + bp_ref[...])                              # [T, D]

    # ---- cognitive processor: cog = fused @ Wc + bc ; edge = mean_t @ We ---
    cog = _mm(fused, wc_ref[...]) + bc_ref[...]          # [T, D]
    speaker_ref[...] = cog
    pooled = jnp.mean(cog, axis=0, keepdims=True)        # [1, D] f32 XLU reduce
    edge = _mm(pooled, we_edge_ref[...])                 # [1, E]
    edge_ref[...] = edge

    # ---- motor.inverse (inference path; no grads flow through pallas) ------
    pred = _mm(cog, winv_ref[...]) + _mm(edge, weinv_ref[...])   # [T, D]

    # ---- get_nearest: MSE vs each pair_target.T, native [K, D, T] layout ---
    # dist_k = (||pred||^2 + ||tgt_k||^2 - 2 * <pred^T, tgt_k>) / (T*D)
    pred_t = pred.T                                      # [D, T] (one transpose)
    pred_nrm = jnp.sum(pred * pred)
    inv_td = 1.0 / float(T * D)

    best_dist = None
    best_tgt = None
    for k in range(K):                                   # K static -> unrolled
        tgt_k = tgt_ref[k]                               # [D, T], native layout
        cross = jnp.sum(pred_t * tgt_k)
        tnrm = jnp.sum(tgt_k * tgt_k)
        d_k = (pred_nrm + tnrm - 2.0 * cross) * inv_td
        if best_dist is None:
            best_dist, best_tgt = d_k, tgt_k
        else:
            take = (d_k < best_dist).astype(jnp.float32)  # strict '<' keeps 1st
            best_dist = jnp.minimum(d_k, best_dist)
            best_tgt = take * tgt_k + (1.0 - take) * best_tgt
    nearest = best_tgt.T                                 # [T, D]
    nearest_ref[...] = nearest

    # ---- motor processor forward on nearest targets ------------------------
    s = log_s_ref[...]                                   # [1, D] log-scales
    h = _mm(nearest, wm_ref[...]) + _mm(edge, we_motor_ref[...])
    listener_ref[...] = h * jnp.exp(s)                   # EUP exp, VPU mul
    logdet_ref[...] = float(T) * jnp.sum(s, axis=1, keepdims=True)   # [1, 1]


@jax.jit
def mhp_fused_forward(video, audio, targets, p):
    B, T, Dv = video.shape
    Da = audio.shape[-1]
    K = targets.shape[1]
    D = p["wc"].shape[0]
    E = p["we_edge"].shape[1]

    def per_batch(tail):
        # squeeze the batch dim; last two block dims == full array dims
        return pl.BlockSpec((None,) + tail, lambda b, t=len(tail): (b,) + (0,) * t)

    def whole(arr):
        # grid-invariant operand: constant block index -> fetched once
        return pl.BlockSpec(arr.shape, lambda b, n=arr.ndim: (0,) * n)

    in_specs = [
        per_batch((T, Dv)),            # video
        per_batch((T, Da)),            # audio
        per_batch((K, D, T)),          # targets, native [B, K, D, T] layout
        whole(p["wv"]), whole(p["wa"]), whole(p["bp"]),
        whole(p["wc"]), whole(p["bc"]), whole(p["we_edge"]),
        whole(p["winv"]), whole(p["weinv"]),
        whole(p["wm"]), whole(p["we_motor"]), whole(p["log_s"]),
    ]
    out_specs = (
        per_batch((T, D)),             # speaker_feature
        per_batch((1, E)),             # edge
        per_batch((T, D)),             # listener_feature
        per_batch((T, D)),             # nearest_targets
        per_batch((1, 1)),             # logdets (tiny; written once/program)
    )
    out_shape = (
        jax.ShapeDtypeStruct((B, T, D), jnp.float32),
        jax.ShapeDtypeStruct((B, 1, E), jnp.float32),
        jax.ShapeDtypeStruct((B, T, D), jnp.float32),
        jax.ShapeDtypeStruct((B, T, D), jnp.float32),
        jax.ShapeDtypeStruct((B, 1, 1), jnp.float32),
    )

    # Advisory scheduling hint for XLA around the custom call.
    flops = 2 * B * (T * Dv * D + T * Da * D + 3 * T * D * D + D * E + 2 * E * D)
    bytes_accessed = 4 * (video.size + audio.size + targets.size
                          + sum(int(p[k].size) for k in p)
                          + B * (3 * T * D + E + 1))
    cost = pl.CostEstimate(flops=flops, transcendentals=B * D,
                           bytes_accessed=bytes_accessed)

    speaker, edge3, listener, nearest, logdet3 = pl.pallas_call(
        _mhp_fused_kernel,
        grid=(B,),
        in_specs=in_specs,
        out_specs=out_specs,
        out_shape=out_shape,
        cost_estimate=cost,
        compiler_params=pltpu.CompilerParams(
            dimension_semantics=("parallel",),        # megacore split on v7x
            vmem_limit_bytes=32 * 1024 * 1024,        # safe on v5e/v6e/v7x
        ),
    )(video, audio, targets,
      p["wv"], p["wa"], p["bp"], p["wc"], p["bc"], p["we_edge"],
      p["winv"], p["weinv"], p["wm"], p["we_motor"], p["log_s"])

    return speaker, edge3[:, 0, :], listener, nearest, logdet3[:, 0, 0]


class MHPPallas:
    """MHP with no_inverse=False, neighbor_pattern='nearest', dist='MSE'."""

    def __init__(self, params):
        self.p = params

    def forward(self, video_inputs, audio_inputs, targets, lengthes=None):
        # TODO(synk): single-modality (None video/audio), the 'all'
        # neighbor_pattern (repeat_interleave by lengthes), the no_inverse
        # branch, DTW distance, and sample()/inverse() are not exercised here.
        assert video_inputs is not None and audio_inputs is not None
        speaker, edge, listener, nearest, logdets = mhp_fused_forward(
            video_inputs, audio_inputs, targets, self.p)
        params = (self.p["wc"], self.p["bc"])   # cognitive-processor params
        return speaker, listener, params, edge, nearest, logdets


def make_params(key, Dv, Da, D, E):
    ks = jax.random.split(key, 10)
    s = 0.1
    return {
        "wv":       s * jax.random.normal(ks[0], (Dv, D), jnp.float32),
        "wa":       s * jax.random.normal(ks[1], (Da, D), jnp.float32),
        "bp":       s * jax.random.normal(ks[2], (1, D), jnp.float32),
        "wc":       s * jax.random.normal(ks[3], (D, D), jnp.float32),
        "bc":       s * jax.random.normal(ks[4], (1, D), jnp.float32),
        "we_edge":  s * jax.random.normal(ks[5], (D, E), jnp.float32),
        "winv":     s * jax.random.normal(ks[6], (D, D), jnp.float32),
        "weinv":    s * jax.random.normal(ks[7], (E, D), jnp.float32),
        "wm":       s * jax.random.normal(ks[8], (D, D), jnp.float32),
        "we_motor": s * jax.random.normal(ks[9], (E, D), jnp.float32),
        "log_s":    jnp.zeros((1, D), jnp.float32),
    }


def mhp_reference(video, audio, targets, p):
    """Pure-JAX f32 reference of the same forward path (for sanity checking)."""
    B, T, _ = video.shape
    fused = (jnp.einsum('btv,vd->btd', video, p["wv"])
             + jnp.einsum('bta,ad->btd', audio, p["wa"]) + p["bp"][None])
    cog = jnp.einsum('btd,de->bte', fused, p["wc"]) + p["bc"][None]
    edge = jnp.einsum('bd,de->be', jnp.mean(cog, axis=1), p["we_edge"])
    pred = (jnp.einsum('btd,de->bte', cog, p["winv"])
            + (edge @ p["weinv"])[:, None, :])
    tgt_td = jnp.swapaxes(targets, 2, 3)                    # [B, K, T, D]
    diff = pred[:, None] - tgt_td
    dist = jnp.mean(diff * diff, axis=(2, 3))                # [B, K]
    idx = jnp.argmin(dist, axis=1)                           # first-min tie-break
    nearest = jnp.take_along_axis(tgt_td, idx[:, None, None, None], axis=1)[:, 0]
    h = (jnp.einsum('btd,de->bte', nearest, p["wm"])
         + (edge @ p["we_motor"])[:, None, :])
    listener = h * jnp.exp(p["log_s"])[None]
    logdets = jnp.full((B,), T * jnp.sum(p["log_s"]), jnp.float32)
    return cog, edge, listener, nearest, logdets


if __name__ == "__main__":
    B, T, Dv, Da, D, E, K = 2, 8, 16, 16, 32, 16, 4

    key = jax.random.PRNGKey(0)
    k_par, k_v, k_a, k_t = jax.random.split(key, 4)

    params = make_params(k_par, Dv, Da, D, E)
    video = jax.random.normal(k_v, (B, T, Dv), jnp.float32)
    audio = jax.random.normal(k_a, (B, T, Da), jnp.float32)
    # K candidate pair_targets per batch element, each [D, T] (PyTorch layout).
    targets = jax.random.normal(k_t, (B, K, D, T), jnp.float32)

    model = MHPPallas(params)
    outs = model.forward(video, audio, targets)
    speaker_feature, listener_feature, p, edge, near_t, logdets = outs

    for o in (speaker_feature, listener_feature, edge, near_t, logdets):
        jax.block_until_ready(o)

    assert speaker_feature.shape == (B, T, D)
    assert listener_feature.shape == (B, T, D)
    assert edge.shape == (B, E)
    assert near_t.shape == (B, T, D)
    assert logdets.shape == (B,)

    # Sanity check against a pure-JAX f32 reference (loose tol: bf16 MXU ops).
    r_speaker, r_edge, r_listener, r_nearest, r_logdets = mhp_reference(
        video, audio, targets, params)
    assert jnp.allclose(speaker_feature, r_speaker, atol=5e-2, rtol=5e-2)
    assert jnp.allclose(edge, r_edge, atol=5e-2, rtol=5e-2)
    assert jnp.allclose(listener_feature, r_listener, atol=5e-2, rtol=5e-2)
    assert jnp.array_equal(near_t, r_nearest)         # exact copy of a target
    assert jnp.allclose(logdets, r_logdets, atol=1e-5)

    print("KERNEL_OK")
</pallas_src>

<mosaic_0001>
module attributes {stable_mosaic.version = 11 : i64} {
  func.func @_mhp_fused_kernel(%arg0: i32, %arg1: memref<1x8x16xf32, #tpu.memory_space<vmem>>, %arg2: memref<1x8x16xf32, #tpu.memory_space<vmem>>, %arg3: memref<1x4x32x8xf32, #tpu.memory_space<vmem>>, %arg4: memref<16x32xf32, #tpu.memory_space<vmem>>, %arg5: memref<16x32xf32, #tpu.memory_space<vmem>>, %arg6: memref<1x32xf32, #tpu.memory_space<vmem>>, %arg7: memref<32x32xf32, #tpu.memory_space<vmem>>, %arg8: memref<1x32xf32, #tpu.memory_space<vmem>>, %arg9: memref<32x16xf32, #tpu.memory_space<vmem>>, %arg10: memref<32x32xf32, #tpu.memory_space<vmem>>, %arg11: memref<16x32xf32, #tpu.memory_space<vmem>>, %arg12: memref<32x32xf32, #tpu.memory_space<vmem>>, %arg13: memref<16x32xf32, #tpu.memory_space<vmem>>, %arg14: memref<1x32xf32, #tpu.memory_space<vmem>>, %arg15: memref<1x8x32xf32, #tpu.memory_space<vmem>>, %arg16: memref<1x1x16xf32, #tpu.memory_space<vmem>>, %arg17: memref<1x8x32xf32, #tpu.memory_space<vmem>>, %arg18: memref<1x8x32xf32, #tpu.memory_space<vmem>>, %arg19: memref<1x1x1xf32, #tpu.memory_space<vmem>>) attributes {dimension_semantics = [#tpu.dimension_semantics<parallel>], iteration_bounds = array<i64: 2>, scalar_prefetch = 0 : i64, scratch_operands = 0 : i64, tpu.core_type = #tpu.core_type<tc>, window_params = [{transform_indices = @transform_0, window_bounds = array<i64: 1, 8, 16>}, {transform_indices = @transform_1, window_bounds = array<i64: 1, 8, 16>}, {transform_indices = @transform_2, window_bounds = array<i64: 1, 4, 32, 8>}, {pipeline_mode = #tpu.pipeline_mode<synchronous>, transform_indices = @transform_3, window_bounds = array<i64: 16, 32>}, {pipeline_mode = #tpu.pipeline_mode<synchronous>, transform_indices = @transform_4, window_bounds = array<i64: 16, 32>}, {pipeline_mode = #tpu.pipeline_mode<synchronous>, transform_indices = @transform_5, window_bounds = array<i64: 1, 32>}, {pipeline_mode = #tpu.pipeline_mode<synchronous>, transform_indices = @transform_6, window_bounds = array<i64: 32, 32>}, {pipeline_mode = #tpu.pipeline_mode<synchronous>, transform_indices = @transform_7, window_bounds = array<i64: 1, 32>}, {pipeline_mode = #tpu.pipeline_mode<synchronous>, transform_indices = @transform_8, window_bounds = array<i64: 32, 16>}, {pipeline_mode = #tpu.pipeline_mode<synchronous>, transform_indices = @transform_9, window_bounds = array<i64: 32, 32>}, {pipeline_mode = #tpu.pipeline_mode<synchronous>, transform_indices = @transform_10, window_bounds = array<i64: 16, 32>}, {pipeline_mode = #tpu.pipeline_mode<synchronous>, transform_indices = @transform_11, window_bounds = array<i64: 32, 32>}, {pipeline_mode = #tpu.pipeline_mode<synchronous>, transform_indices = @transform_12, window_bounds = array<i64: 16, 32>}, {pipeline_mode = #tpu.pipeline_mode<synchronous>, transform_indices = @transform_13, window_bounds = array<i64: 1, 32>}, {transform_indices = @transform_14, window_bounds = array<i64: 1, 8, 32>}, {transform_indices = @transform_15, window_bounds = array<i64: 1, 1, 16>}, {transform_indices = @transform_16, window_bounds = array<i64: 1, 8, 32>}, {transform_indices = @transform_17, window_bounds = array<i64: 1, 8, 32>}, {transform_indices = @transform_18, window_bounds = array<i64: 1, 1, 1>}]} {
    %c0 = arith.constant 0 : index
    %c0_0 = arith.constant 0 : index
    %c0_1 = arith.constant 0 : index
    %0 = vector.load %arg1[%c0, %c0_0, %c0_1] : memref<1x8x16xf32, #tpu.memory_space<vmem>>, vector<1x8x16xf32>
    %1 = vector.shape_cast %0 : vector<1x8x16xf32> to vector<8x16xf32>
    %c0_2 = arith.constant 0 : index
    %c0_3 = arith.constant 0 : index
    %2 = vector.load %arg4[%c0_2, %c0_3] : memref<16x32xf32, #tpu.memory_space<vmem>>, vector<16x32xf32>
    %3 = arith.truncf %1 : vector<8x16xf32> to vector<8x16xbf16>
    %4 = arith.truncf %2 : vector<16x32xf32> to vector<16x32xbf16>
    %cst = arith.constant dense<0.000000e+00> : vector<8x32xf32>
    %5 = tpu.matmul %3, %4, %cst {dimension_numbers = #tpu.dot_dimension_numbers<[1], [0], [0], [1], [0, 0, 1, 1], [], []>} : vector<8x16xbf16>, vector<16x32xbf16>, vector<8x32xf32> -> vector<8x32xf32>
    %c0_4 = arith.constant 0 : index
    %c0_5 = arith.constant 0 : index
    %c0_6 = arith.constant 0 : index
    %6 = vector.load %arg2[%c0_4, %c0_5, %c0_6] : memref<1x8x16xf32, #tpu.memory_space<vmem>>, vector<1x8x16xf32>
    %7 = vector.shape_cast %6 : vector<1x8x16xf32> to vector<8x16xf32>
    %c0_7 = arith.constant 0 : index
    %c0_8 = arith.constant 0 : index
    %8 = vector.load %arg5[%c0_7, %c0_8] : memref<16x32xf32, #tpu.memory_space<vmem>>, vector<16x32xf32>
    %9 = arith.truncf %7 : vector<8x16xf32> to vector<8x16xbf16>
    %10 = arith.truncf %8 : vector<16x32xf32> to vector<16x32xbf16>
    %cst_9 = arith.constant dense<0.000000e+00> : vector<8x32xf32>
    %11 = tpu.matmul %9, %10, %cst_9 {dimension_numbers = #tpu.dot_dimension_numbers<[1], [0], [0], [1], [0, 0, 1, 1], [], []>} : vector<8x16xbf16>, vector<16x32xbf16>, vector<8x32xf32> -> vector<8x32xf32>
    %12 = arith.addf %5, %11 : vector<8x32xf32>
    %c0_10 = arith.constant 0 : index
    %c0_11 = arith.constant 0 : index
    %13 = vector.load %arg6[%c0_10, %c0_11] : memref<1x32xf32, #tpu.memory_space<vmem>>, vector<1x32xf32>
    %14 = vector.broadcast %13 : vector<1x32xf32> to vector<8x32xf32>
    %15 = arith.addf %12, %14 : vector<8x32xf32>
    %c0_12 = arith.constant 0 : index
    %c0_13 = arith.constant 0 : index
    %16 = vector.load %arg7[%c0_12, %c0_13] : memref<32x32xf32, #tpu.memory_space<vmem>>, vector<32x32xf32>
    %17 = arith.truncf %15 : vector<8x32xf32> to vector<8x32xbf16>
    %18 = arith.truncf %16 : vector<32x32xf32> to vector<32x32xbf16>
    %cst_14 = arith.constant dense<0.000000e+00> : vector<8x32xf32>
    %19 = tpu.matmul %17, %18, %cst_14 {dimension_numbers = #tpu.dot_dimension_numbers<[1], [0], [0], [1], [0, 0, 1, 1], [], []>} : vector<8x32xbf16>, vector<32x32xbf16>, vector<8x32xf32> -> vector<8x32xf32>
    %c0_15 = arith.constant 0 : index
    %c0_16 = arith.constant 0 : index
    %20 = vector.load %arg8[%c0_15, %c0_16] : memref<1x32xf32, #tpu.memory_space<vmem>>, vector<1x32xf32>
    %21 = vector.broadcast %20 : vector<1x32xf32> to vector<8x32xf32>
    %22 = arith.addf %19, %21 : vector<8x32xf32>
    %c0_17 = arith.constant 0 : index
    %c0_18 = arith.constant 0 : index
    %c0_19 = arith.constant 0 : index
    %23 = vector.load %arg15[%c0_17, %c0_18, %c0_19] : memref<1x8x32xf32, #tpu.memory_space<vmem>>, vector<1x8x32xf32>
    %24 = vector.shape_cast %23 : vector<1x8x32xf32> to vector<8x32xf32>
    %25 = vector.shape_cast %22 : vector<8x32xf32> to vector<1x8x32xf32>
    tpu.vector_store %arg15[%c0_17, %c0_18, %c0_19], %25 {strides = array<i32>} : memref<1x8x32xf32, #tpu.memory_space<vmem>>, vector<1x8x32xf32>,
    %cst_20 = arith.constant dense<0.000000e+00> : vector<32xf32>
    %26 = vector.multi_reduction <add>, %22, %cst_20 [0] : vector<8x32xf32> to vector<32xf32>
    %27 = vector.shape_cast %26 : vector<32xf32> to vector<1x32xf32>
    %cst_21 = arith.constant 8.000000e+00 : f32
    %28 = vector.broadcast %cst_21 : f32 to vector<1x32xf32>
    %29 = arith.divf %27, %28 : vector<1x32xf32>
    %c0_22 = arith.constant 0 : index
    %c0_23 = arith.constant 0 : index
    %30 = vector.load %arg9[%c0_22, %c0_23] : memref<32x16xf32, #tpu.memory_space<vmem>>, vector<32x16xf32>
    %31 = arith.truncf %29 : vector<1x32xf32> to vector<1x32xbf16>
    %32 = arith.truncf %30 : vector<32x16xf32> to vector<32x16xbf16>
    %cst_24 = arith.constant dense<0.000000e+00> : vector<1x16xf32>
    %33 = tpu.matmul %31, %32, %cst_24 {dimension_numbers = #tpu.dot_dimension_numbers<[1], [0], [0], [1], [0, 0, 1, 1], [], []>} : vector<1x32xbf16>, vector<32x16xbf16>, vector<1x16xf32> -> vector<1x16xf32>
    %c0_25 = arith.constant 0 : index
    %c0_26 = arith.constant 0 : index
    %c0_27 = arith.constant 0 : index
    %34 = vector.load %arg16[%c0_25, %c0_26, %c0_27] : memref<1x1x16xf32, #tpu.memory_space<vmem>>, vector<1x1x16xf32>
    %35 = vector.shape_cast %34 : vector<1x1x16xf32> to vector<1x16xf32>
    %36 = vector.shape_cast %33 : vector<1x16xf32> to vector<1x1x16xf32>
    tpu.vector_store %arg16[%c0_25, %c0_26, %c0_27], %36 {strides = array<i32>} : memref<1x1x16xf32, #tpu.memory_space<vmem>>, vector<1x1x16xf32>,
    %c0_28 = arith.constant 0 : index
    %c0_29 = arith.constant 0 : index
    %37 = vector.load %arg10[%c0_28, %c0_29] : memref<32x32xf32, #tpu.memory_space<vmem>>, vector<32x32xf32>
    %38 = arith.truncf %22 : vector<8x32xf32> to vector<8x32xbf16>
    %39 = arith.truncf %37 : vector<32x32xf32> to vector<32x32xbf16>
    %cst_30 = arith.constant dense<0.000000e+00> : vector<8x32xf32>
    %40 = tpu.matmul %38, %39, %cst_30 {dimension_numbers = #tpu.dot_dimension_numbers<[1], [0], [0], [1], [0, 0, 1, 1], [], []>} : vector<8x32xbf16>, vector<32x32xbf16>, vector<8x32xf32> -> vector<8x32xf32>
    %c0_31 = arith.constant 0 : index
    %c0_32 = arith.constant 0 : index
    %41 = vector.load %arg11[%c0_31, %c0_32] : memref<16x32xf32, #tpu.memory_space<vmem>>, vector<16x32xf32>
    %42 = arith.truncf %33 : vector<1x16xf32> to vector<1x16xbf16>
    %43 = arith.truncf %41 : vector<16x32xf32> to vector<16x32xbf16>
    %cst_33 = arith.constant dense<0.000000e+00> : vector<1x32xf32>
    %44 = tpu.matmul %42, %43, %cst_33 {dimension_numbers = #tpu.dot_dimension_numbers<[1], [0], [0], [1], [0, 0, 1, 1], [], []>} : vector<1x16xbf16>, vector<16x32xbf16>, vector<1x32xf32> -> vector<1x32xf32>
    %45 = vector.broadcast %44 : vector<1x32xf32> to vector<8x32xf32>
    %46 = arith.addf %40, %45 : vector<8x32xf32>
    %47 = tpu.transpose %46, [1, 0] : vector<8x32xf32> -> vector<32x8xf32>
    %48 = arith.mulf %46, %46 : vector<8x32xf32>
    %49 = vector.shape_cast %48 : vector<8x32xf32> to vector<1x8x32xf32>
    %cst_34 = arith.constant dense<0.000000e+00> : vector<1xf32>
    %50 = vector.multi_reduction <add>, %49, %cst_34 [1, 2] : vector<1x8x32xf32> to vector<1xf32>
    %51 = vector.shape_cast %50 : vector<1xf32> to vector<1x1x1xf32>
    %52 = vector.extract %51[0, 0, 0] : f32 from vector<1x1x1xf32>
    %c0_35 = arith.constant 0 : index
    %c0_36 = arith.constant 0 : index
    %c0_37 = arith.constant 0 : index
    %c0_38 = arith.constant 0 : index
    %53 = vector.load %arg3[%c0_35, %c0_36, %c0_37, %c0_38] : memref<1x4x32x8xf32, #tpu.memory_space<vmem>>, vector<1x1x32x8xf32>
    %54 = vector.shape_cast %53 : vector<1x1x32x8xf32> to vector<32x8xf32>
    %55 = arith.mulf %47, %54 : vector<32x8xf32>
    %56 = vector.shape_cast %55 : vector<32x8xf32> to vector<1x32x8xf32>
    %cst_39 = arith.constant dense<0.000000e+00> : vector<1xf32>
    %57 = vector.multi_reduction <add>, %56, %cst_39 [1, 2] : vector<1x32x8xf32> to vector<1xf32>
    %58 = vector.shape_cast %57 : vector<1xf32> to vector<1x1x1xf32>
    %59 = vector.extract %58[0, 0, 0] : f32 from vector<1x1x1xf32>
    %60 = arith.mulf %54, %54 : vector<32x8xf32>
    %61 = vector.shape_cast %60 : vector<32x8xf32> to vector<1x32x8xf32>
    %cst_40 = arith.constant dense<0.000000e+00> : vector<1xf32>
    %62 = vector.multi_reduction <add>, %61, %cst_40 [1, 2] : vector<1x32x8xf32> to vector<1xf32>
    %63 = vector.shape_cast %62 : vector<1xf32> to vector<1x1x1xf32>
    %64 = vector.extract %63[0, 0, 0] : f32 from vector<1x1x1xf32>
    %65 = arith.addf %52, %64 : f32
    %cst_41 = arith.constant 2.000000e+00 : f32
    %66 = arith.mulf %cst_41, %59 : f32
    %67 = arith.subf %65, %66 : f32
    %cst_42 = arith.constant 3.906250e-03 : f32
    %68 = arith.mulf %67, %cst_42 : f32
    %c0_43 = arith.constant 0 : index
    %c1 = arith.constant 1 : index
    %c0_44 = arith.constant 0 : index
    %c0_45 = arith.constant 0 : index
    %69 = vector.load %arg3[%c0_43, %c1, %c0_44, %c0_45] : memref<1x4x32x8xf32, #tpu.memory_space<vmem>>, vector<1x1x32x8xf32>
    %70 = vector.shape_cast %69 : vector<1x1x32x8xf32> to vector<32x8xf32>
    %71 = arith.mulf %47, %70 : vector<32x8xf32>
    %72 = vector.shape_cast %71 : vector<32x8xf32> to vector<1x32x8xf32>
    %cst_46 = arith.constant dense<0.000000e+00> : vector<1xf32>
    %73 = vector.multi_reduction <add>, %72, %cst_46 [1, 2] : vector<1x32x8xf32> to vector<1xf32>
    %74 = vector.shape_cast %73 : vector<1xf32> to vector<1x1x1xf32>
    %75 = vector.extract %74[0, 0, 0] : f32 from vector<1x1x1xf32>
    %76 = arith.mulf %70, %70 : vector<32x8xf32>
    %77 = vector.shape_cast %76 : vector<32x8xf32> to vector<1x32x8xf32>
    %cst_47 = arith.constant dense<0.000000e+00> : vector<1xf32>
    %78 = vector.multi_reduction <add>, %77, %cst_47 [1, 2] : vector<1x32x8xf32> to vector<1xf32>
    %79 = vector.shape_cast %78 : vector<1xf32> to vector<1x1x1xf32>
    %80 = vector.extract %79[0, 0, 0] : f32 from vector<1x1x1xf32>
    %81 = arith.addf %52, %80 : f32
    %cst_48 = arith.constant 2.000000e+00 : f32
    %82 = arith.mulf %cst_48, %75 : f32
    %83 = arith.subf %81, %82 : f32
    %cst_49 = arith.constant 3.906250e-03 : f32
    %84 = arith.mulf %83, %cst_49 : f32
    %85 = arith.cmpf olt, %84, %68 : f32
    %86 = arith.extui %85 : i1 to i32
    %87 = arith.sitofp %86 : i32 to f32
    %88 = arith.minimumf %84, %68 : f32
    %89 = vector.broadcast %87 : f32 to vector<32x8xf32>
    %90 = arith.mulf %89, %70 : vector<32x8xf32>
    %cst_50 = arith.constant 1.000000e+00 : f32
    %91 = arith.subf %cst_50, %87 : f32
    %92 = vector.broadcast %91 : f32 to vector<32x8xf32>
    %93 = arith.mulf %92, %54 : vector<32x8xf32>
    %94 = arith.addf %90, %93 : vector<32x8xf32>
    %c0_51 = arith.constant 0 : index
    %c2 = arith.constant 2 : index
    %c0_52 = arith.constant 0 : index
    %c0_53 = arith.constant 0 : index
    %95 = vector.load %arg3[%c0_51, %c2, %c0_52, %c0_53] : memref<1x4x32x8xf32, #tpu.memory_space<vmem>>, vector<1x1x32x8xf32>
    %96 = vector.shape_cast %95 : vector<1x1x32x8xf32> to vector<32x8xf32>
    %97 = arith.mulf %47, %96 : vector<32x8xf32>
    %98 = vector.shape_cast %97 : vector<32x8xf32> to vector<1x32x8xf32>
    %cst_54 = arith.constant dense<0.000000e+00> : vector<1xf32>
    %99 = vector.multi_reduction <add>, %98, %cst_54 [1, 2] : vector<1x32x8xf32> to vector<1xf32>
    %100 = vector.shape_cast %99 : vector<1xf32> to vector<1x1x1xf32>
    %101 = vector.extract %100[0, 0, 0] : f32 from vector<1x1x1xf32>
    %102 = arith.mulf %96, %96 : vector<32x8xf32>
    %103 = vector.shape_cast %102 : vector<32x8xf32> to vector<1x32x8xf32>
    %cst_55 = arith.constant dense<0.000000e+00> : vector<1xf32>
    %104 = vector.multi_reduction <add>, %103, %cst_55 [1, 2] : vector<1x32x8xf32> to vector<1xf32>
    %105 = vector.shape_cast %104 : vector<1xf32> to vector<1x1x1xf32>
    %106 = vector.extract %105[0, 0, 0] : f32 from vector<1x1x1xf32>
    %107 = arith.addf %52, %106 : f32
    %cst_56 = arith.constant 2.000000e+00 : f32
    %108 = arith.mulf %cst_56, %101 : f32
    %109 = arith.subf %107, %108 : f32
    %cst_57 = arith.constant 3.906250e-03 : f32
    %110 = arith.mulf %109, %cst_57 : f32
    %111 = arith.cmpf olt, %110, %88 : f32
    %112 = arith.extui %111 : i1 to i32
    %113 = arith.sitofp %112 : i32 to f32
    %114 = arith.minimumf %110, %88 : f32
    %115 = vector.broadcast %113 : f32 to vector<32x8xf32>
    %116 = arith.mulf %115, %96 : vector<32x8xf32>
    %cst_58 = arith.constant 1.000000e+00 : f32
    %117 = arith.subf %cst_58, %113 : f32
    %118 = vector.broadcast %117 : f32 to vector<32x8xf32>
    %119 = arith.mulf %118, %94 : vector<32x8xf32>
    %120 = arith.addf %116, %119 : vector<32x8xf32>
    %c0_59 = arith.constant 0 : index
    %c3 = arith.constant 3 : index
    %c0_60 = arith.constant 0 : index
    %c0_61 = arith.constant 0 : index
    %121 = vector.load %arg3[%c0_59, %c3, %c0_60, %c0_61] : memref<1x4x32x8xf32, #tpu.memory_space<vmem>>, vector<1x1x32x8xf32>
    %122 = vector.shape_cast %121 : vector<1x1x32x8xf32> to vector<32x8xf32>
    %123 = arith.mulf %47, %122 : vector<32x8xf32>
    %124 = vector.shape_cast %123 : vector<32x8xf32> to vector<1x32x8xf32>
    %cst_62 = arith.constant dense<0.000000e+00> : vector<1xf32>
    %125 = vector.multi_reduction <add>, %124, %cst_62 [1, 2] : vector<1x32x8xf32> to vector<1xf32>
    %126 = vector.shape_cast %125 : vector<1xf32> to vector<1x1x1xf32>
    %127 = vector.extract %126[0, 0, 0] : f32 from vector<1x1x1xf32>
    %128 = arith.mulf %122, %122 : vector<32x8xf32>
    %129 = vector.shape_cast %128 : vector<32x8xf32> to vector<1x32x8xf32>
    %cst_63 = arith.constant dense<0.000000e+00> : vector<1xf32>
    %130 = vector.multi_reduction <add>, %129, %cst_63 [1, 2] : vector<1x32x8xf32> to vector<1xf32>
    %131 = vector.shape_cast %130 : vector<1xf32> to vector<1x1x1xf32>
    %132 = vector.extract %131[0, 0, 0] : f32 from vector<1x1x1xf32>
    %133 = arith.addf %52, %132 : f32
    %cst_64 = arith.constant 2.000000e+00 : f32
    %134 = arith.mulf %cst_64, %127 : f32
    %135 = arith.subf %133, %134 : f32
    %cst_65 = arith.constant 3.906250e-03 : f32
    %136 = arith.mulf %135, %cst_65 : f32
    %137 = arith.cmpf olt, %136, %114 : f32
    %138 = arith.extui %137 : i1 to i32
    %139 = arith.sitofp %138 : i32 to f32
    %140 = vector.broadcast %139 : f32 to vector<32x8xf32>
    %141 = arith.mulf %140, %122 : vector<32x8xf32>
    %cst_66 = arith.constant 1.000000e+00 : f32
    %142 = arith.subf %cst_66, %139 : f32
    %143 = vector.broadcast %142 : f32 to vector<32x8xf32>
    %144 = arith.mulf %143, %120 : vector<32x8xf32>
    %145 = arith.addf %141, %144 : vector<32x8xf32>
    %146 = tpu.transpose %145, [1, 0] : vector<32x8xf32> -> vector<8x32xf32>
    %c0_67 = arith.constant 0 : index
    %c0_68 = arith.constant 0 : index
    %c0_69 = arith.constant 0 : index
    %147 = vector.load %arg18[%c0_67, %c0_68, %c0_69] : memref<1x8x32xf32, #tpu.memory_space<vmem>>, vector<1x8x32xf32>
    %148 = vector.shape_cast %147 : vector<1x8x32xf32> to vector<8x32xf32>
    %149 = vector.shape_cast %146 : vector<8x32xf32> to vector<1x8x32xf32>
    tpu.vector_store %arg18[%c0_67, %c0_68, %c0_69], %149 {strides = array<i32>} : memref<1x8x32xf32, #tpu.memory_space<vmem>>, vector<1x8x32xf32>,
    %c0_70 = arith.constant 0 : index
    %c0_71 = arith.constant 0 : index
    %150 = vector.load %arg14[%c0_70, %c0_71] : memref<1x32xf32, #tpu.memory_space<vmem>>, vector<1x32xf32>
    %c0_72 = arith.constant 0 : index
    %c0_73 = arith.constant 0 : index
    %151 = vector.load %arg12[%c0_72, %c0_73] : memref<32x32xf32, #tpu.memory_space<vmem>>, vector<32x32xf32>
    %152 = arith.truncf %146 : vector<8x32xf32> to vector<8x32xbf16>
    %153 = arith.truncf %151 : vector<32x32xf32> to vector<32x32xbf16>
    %cst_74 = arith.constant dense<0.000000e+00> : vector<8x32xf32>
    %154 = tpu.matmul %152, %153, %cst_74 {dimension_numbers = #tpu.dot_dimension_numbers<[1], [0], [0], [1], [0, 0, 1, 1], [], []>} : vector<8x32xbf16>, vector<32x32xbf16>, vector<8x32xf32> -> vector<8x32xf32>
    %c0_75 = arith.constant 0 : index
    %c0_76 = arith.constant 0 : index
    %155 = vector.load %arg13[%c0_75, %c0_76] : memref<16x32xf32, #tpu.memory_space<vmem>>, vector<16x32xf32>
    %156 = arith.truncf %33 : vector<1x16xf32> to vector<1x16xbf16>
    %157 = arith.truncf %155 : vector<16x32xf32> to vector<16x32xbf16>
    %cst_77 = arith.constant dense<0.000000e+00> : vector<1x32xf32>
    %158 = tpu.matmul %156, %157, %cst_77 {dimension_numbers = #tpu.dot_dimension_numbers<[1], [0], [0], [1], [0, 0, 1, 1], [], []>} : vector<1x16xbf16>, vector<16x32xbf16>, vector<1x32xf32> -> vector<1x32xf32>
    %159 = vector.broadcast %158 : vector<1x32xf32> to vector<8x32xf32>
    %160 = arith.addf %154, %159 : vector<8x32xf32>
    %161 = math.exp %150 : vector<1x32xf32>
    %162 = vector.broadcast %161 : vector<1x32xf32> to vector<8x32xf32>
    %163 = arith.mulf %160, %162 : vector<8x32xf32>
    %c0_78 = arith.constant 0 : index
    %c0_79 = arith.constant 0 : index
    %c0_80 = arith.constant 0 : index
    %164 = vector.load %arg17[%c0_78, %c0_79, %c0_80] : memref<1x8x32xf32, #tpu.memory_space<vmem>>, vector<1x8x32xf32>
    %165 = vector.shape_cast %164 : vector<1x8x32xf32> to vector<8x32xf32>
    %166 = vector.shape_cast %163 : vector<8x32xf32> to vector<1x8x32xf32>
    tpu.vector_store %arg17[%c0_78, %c0_79, %c0_80], %166 {strides = array<i32>} : memref<1x8x32xf32, #tpu.memory_space<vmem>>, vector<1x8x32xf32>,
    %cst_81 = arith.constant dense<0.000000e+00> : vector<1xf32>
    %167 = vector.multi_reduction <add>, %150, %cst_81 [1] : vector<1x32xf32> to vector<1xf32>
    %168 = vector.shape_cast %167 : vector<1xf32> to vector<1x1xf32>
    %cst_82 = arith.constant 8.000000e+00 : f32
    %169 = vector.broadcast %cst_82 : f32 to vector<1x1xf32>
    %170 = arith.mulf %169, %168 : vector<1x1xf32>
    %c0_83 = arith.constant 0 : index
    %c0_84 = arith.constant 0 : index
    %c0_85 = arith.constant 0 : index
    %171 = vector.load %arg19[%c0_83, %c0_84, %c0_85] : memref<1x1x1xf32, #tpu.memory_space<vmem>>, vector<1x1x1xf32>
    %172 = vector.shape_cast %171 : vector<1x1x1xf32> to vector<1x1xf32>
    %173 = vector.shape_cast %170 : vector<1x1xf32> to vector<1x1x1xf32>
    tpu.vector_store %arg19[%c0_83, %c0_84, %c0_85], %173 {strides = array<i32>} : memref<1x1x1xf32, #tpu.memory_space<vmem>>, vector<1x1x1xf32>,
    return
  }
  func.func @transform_0(%arg0: i32) -> (i32, i32, i32) {
    %c0_i32 = arith.constant 0 : i32
    %c0_i32_0 = arith.constant 0 : i32
    %c0_i32_1 = arith.constant 0 : i32
    return %arg0, %c0_i32, %c0_i32_0 : i32, i32, i32
  }
  func.func @transform_1(%arg0: i32) -> (i32, i32, i32) {
    %c0_i32 = arith.constant 0 : i32
    %c0_i32_0 = arith.constant 0 : i32
    %c0_i32_1 = arith.constant 0 : i32
    return %arg0, %c0_i32, %c0_i32_0 : i32, i32, i32
  }
  func.func @transform_2(%arg0: i32) -> (i32, i32, i32, i32) {
    %c0_i32 = arith.constant 0 : i32
    %c0_i32_0 = arith.constant 0 : i32
    %c0_i32_1 = arith.constant 0 : i32
    %c0_i32_2 = arith.constant 0 : i32
    return %arg0, %c0_i32, %c0_i32_0, %c0_i32_1 : i32, i32, i32, i32
  }
  func.func @transform_3(%arg0: i32) -> (i32, i32) {
    %c0_i32 = arith.constant 0 : i32
    %c0_i32_0 = arith.constant 0 : i32
    %c0_i32_1 = arith.constant 0 : i32
    return %c0_i32, %c0_i32_0 : i32, i32
  }
  func.func @transform_4(%arg0: i32) -> (i32, i32) {
    %c0_i32 = arith.constant 0 : i32
    %c0_i32_0 = arith.constant 0 : i32
    %c0_i32_1 = arith.constant 0 : i32
    return %c0_i32, %c0_i32_0 : i32, i32
  }
  func.func @transform_5(%arg0: i32) -> (i32, i32) {
    %c0_i32 = arith.constant 0 : i32
    %c0_i32_0 = arith.constant 0 : i32
    %c0_i32_1 = arith.constant 0 : i32
    return %c0_i32, %c0_i32_0 : i32, i32
  }
  func.func @transform_6(%arg0: i32) -> (i32, i32) {
    %c0_i32 = arith.constant 0 : i32
    %c0_i32_0 = arith.constant 0 : i32
    %c0_i32_1 = arith.constant 0 : i32
    return %c0_i32, %c0_i32_0 : i32, i32
  }
  func.func @transform_7(%arg0: i32) -> (i32, i32) {
    %c0_i32 = arith.constant 0 : i32
    %c0_i32_0 = arith.constant 0 : i32
    %c0_i32_1 = arith.constant 0 : i32
    return %c0_i32, %c0_i32_0 : i32, i32
  }
  func.func @transform_8(%arg0: i32) -> (i32, i32) {
    %c0_i32 = arith.constant 0 : i32
    %c0_i32_0 = arith.constant 0 : i32
    %c0_i32_1 = arith.constant 0 : i32
    return %c0_i32, %c0_i32_0 : i32, i32
  }
  func.func @transform_9(%arg0: i32) -> (i32, i32) {
    %c0_i32 = arith.constant 0 : i32
    %c0_i32_0 = arith.constant 0 : i32
    %c0_i32_1 = arith.constant 0 : i32
    return %c0_i32, %c0_i32_0 : i32, i32
  }
  func.func @transform_10(%arg0: i32) -> (i32, i32) {
    %c0_i32 = arith.constant 0 : i32
    %c0_i32_0 = arith.constant 0 : i32
    %c0_i32_1 = arith.constant 0 : i32
    return %c0_i32, %c0_i32_0 : i32, i32
  }
  func.func @transform_11(%arg0: i32) -> (i32, i32) {
    %c0_i32 = arith.constant 0 : i32
    %c0_i32_0 = arith.constant 0 : i32
    %c0_i32_1 = arith.constant 0 : i32
    return %c0_i32, %c0_i32_0 : i32, i32
  }
  func.func @transform_12(%arg0: i32) -> (i32, i32) {
    %c0_i32 = arith.constant 0 : i32
    %c0_i32_0 = arith.constant 0 : i32
    %c0_i32_1 = arith.constant 0 : i32
    return %c0_i32, %c0_i32_0 : i32, i32
  }
  func.func @transform_13(%arg0: i32) -> (i32, i32) {
    %c0_i32 = arith.constant 0 : i32
    %c0_i32_0 = arith.constant 0 : i32
    %c0_i32_1 = arith.constant 0 : i32
    return %c0_i32, %c0_i32_0 : i32, i32
  }
  func.func @transform_14(%arg0: i32) -> (i32, i32, i32) {
    %c0_i32 = arith.constant 0 : i32
    %c0_i32_0 = arith.constant 0 : i32
    %c0_i32_1 = arith.constant 0 : i32
    return %arg0, %c0_i32, %c0_i32_0 : i32, i32, i32
  }
  func.func @transform_15(%arg0: i32) -> (i32, i32, i32) {
    %c0_i32 = arith.constant 0 : i32
    %c0_i32_0 = arith.constant 0 : i32
    %c0_i32_1 = arith.constant 0 : i32
    return %arg0, %c0_i32, %c0_i32_0 : i32, i32, i32
  }
  func.func @transform_16(%arg0: i32) -> (i32, i32, i32) {
    %c0_i32 = arith.constant 0 : i32
    %c0_i32_0 = arith.constant 0 : i32
    %c0_i32_1 = arith.constant 0 : i32
    return %arg0, %c0_i32, %c0_i32_0 : i32, i32, i32
  }
  func.func @transform_17(%arg0: i32) -> (i32, i32, i32) {
    %c0_i32 = arith.constant 0 : i32
    %c0_i32_0 = arith.constant 0 : i32
    %c0_i32_1 = arith.constant 0 : i32
    return %arg0, %c0_i32, %c0_i32_0 : i32, i32, i32
  }
  func.func @transform_18(%arg0: i32) -> (i32, i32, i32) {
    %c0_i32 = arith.constant 0 : i32
    %c0_i32_0 = arith.constant 0 : i32
    %c0_i32_1 = arith.constant 0 : i32
    return %arg0, %c0_i32, %c0_i32_0 : i32, i32, i32
  }
}

</mosaic_0001>

<llo_original>
// kernel: mhp_fused_forward.1
$region0: #{mhp_fused_forward.1}
  #allocation0 [shape = 'u32[]', space=smem, size = 0x4, offset = 0x4, fixed_abs, tag = 'smem constant byte address 0x4 - core index']
  #allocation1 [shape = 'u32[144,128]{1,0:T(1,128)}', space=vmem, size = 0x12000, scoped, tag = 'internal scratch']
  %s0 = inlined_call_operand.vmem [shape: f32[2,8,16], index: 0, kind: input, shape index: {}]
  %s1 = inlined_call_operand.vmem [shape: f32[2,8,16], index: 1, kind: input, shape index: {}]
  %s2 = inlined_call_operand.vmem [shape: f32[2,4,32,8], index: 2, kind: input, shape index: {}]
  %s3 = inlined_call_operand.vmem [shape: f32[16,32], index: 3, kind: input, shape index: {}]
  %s4 = inlined_call_operand.vmem [shape: f32[16,32], index: 4, kind: input, shape index: {}]
  %s5 = inlined_call_operand.vmem [shape: f32[1,32], index: 5, kind: input, shape index: {}]
  %s6 = inlined_call_operand.vmem [shape: f32[32,32], index: 6, kind: input, shape index: {}]
  %s7 = inlined_call_operand.vmem [shape: f32[1,32], index: 7, kind: input, shape index: {}]
  %s8 = inlined_call_operand.vmem [shape: f32[32,16], index: 8, kind: input, shape index: {}]
  %s9 = inlined_call_operand.vmem [shape: f32[32,32], index: 9, kind: input, shape index: {}]
  %s10 = inlined_call_operand.vmem [shape: f32[16,32], index: 10, kind: input, shape index: {}]
  %s11 = inlined_call_operand.vmem [shape: f32[32,32], index: 11, kind: input, shape index: {}]
  %s12 = inlined_call_operand.vmem [shape: f32[16,32], index: 12, kind: input, shape index: {}]
  %s13 = inlined_call_operand.vmem [shape: f32[1,32], index: 13, kind: input, shape index: {}]
  %s14 = inlined_call_operand.hbm [shape: f32[2,8,32], index: 14, kind: output, shape index: {0}]
  %s15 = inlined_call_operand.hbm [shape: f32[2,1,16], index: 15, kind: output, shape index: {1}]
  %s16 = inlined_call_operand.hbm [shape: f32[2,8,32], index: 16, kind: output, shape index: {2}]
  %s17 = inlined_call_operand.hbm [shape: f32[2,8,32], index: 17, kind: output, shape index: {3}]
  %s18 = inlined_call_operand.vmem [shape: f32[2,1,1], index: 18, kind: output, shape index: {4}]
  %19 = xla_tuple %s14, %s15, %s16, %s17, %s18
  %s20 = sld [smem:[#allocation0]]
  $region121: #{mhp_fused_forward.1} parent=0
    _
  %s22 = ssub.s32 1, %s20
  %s23 = scalar_select 0, %s22, %s20
  $region1: #{mhp_fused_forward.1} parent=0
    #allocation2 [shape = 'u8[8192]{0}', space=vmem, size = 0x2000, scoped, tag = 'output window, operand 0']
    #allocation3 [shape = 's32[2]{0}', space=sflag, size = 0x8, scoped, tag = 'scoped memory for mhp_fused_forward.1']
    #allocation4 [shape = 'u8[1024]{0}', space=vmem, size = 0x400, scoped, tag = 'output window, operand 1']
    #allocation5 [shape = 's32[2]{0}', space=sflag, size = 0x8, scoped, tag = 'scoped memory for mhp_fused_forward.1']
    #allocation6 [shape = 'u8[8192]{0}', space=vmem, size = 0x2000, scoped, tag = 'output window, operand 2']
    #allocation7 [shape = 'u8[8192]{0}', space=vmem, size = 0x2000, scoped, tag = 'output window, operand 3']
    #allocation8 [shape = 's32[2]{0}', space=sflag, size = 0x8, scoped, tag = 'scoped memory for mhp_fused_forward.1']
    %24 = vsyncpa [#allocation3], 0
    %s25 = scalar_lea.sflag [#allocation3], 1
    %26 = vsyncpa %s25, 0
    %27 = vsyncpa [#allocation5], 0
    %s28 = scalar_lea.sflag [#allocation5], 1
    %29 = vsyncpa %s28, 0
    %30 = vsyncpa [#allocation8], 0
    %s31 = scalar_lea.sflag [#allocation8], 1
    %32 = vsyncpa %s31, 0
    loop: start=0, step=1, limit=4
    $region2: #{mhp_fused_forward.1} parent=1 // loop_pre_header
      _
    $region3: #{mhp_fused_forward.1} parent=1 // loop_header
      %s34 = sphi 0, %s38
      %p35 = scmp.ge.s32.totalorder %s34, 4
      %s44 = sphi 0, %s46
      %s47 = sphi 0, %s44
      %s48 = sphi 0, %s47
      %s64 = sphi 0, %s48
      %s70 = sphi 0, %s72
      %s73 = sphi 0, %s70
      %s74 = sphi 0, %s73
      %s90 = sphi 0, %s74
      %s96 = sphi 0, %s98
      %s99 = sphi 0, %s96
      %s100 = sphi 0, %s99
      %s116 = sphi 0, %s100
      %s120 = sphi 0, %s120
      %s122 = sphi 0, %s120
      %s123 = sphi 0, %s122
      %s137 = sphi 0, %s123
      %s141 = sphi 0, %s141
      %s143 = sphi 0, %s141
      %s144 = sphi 0, %s143
      %s158 = sphi 0, %s144
      %s162 = sphi 0, %s162
      %s164 = sphi 0, %s162
      %s165 = sphi 0, %s164
      %s179 = sphi 0, %s165
      %s183 = sphi 0, %s183
      %s185 = sphi 0, %s183
      %s186 = sphi 0, %s185
      %s200 = sphi 0, %s186
      %s204 = sphi 0, %s204
      %s206 = sphi 0, %s204
      %s207 = sphi 0, %s206
      %s221 = sphi 0, %s207
      %s225 = sphi 0, %s225
      %s227 = sphi 0, %s225
      %s228 = sphi 0, %s227
      %s242 = sphi 0, %s228
      %s246 = sphi 0, %s246
      %s248 = sphi 0, %s246
      %s249 = sphi 0, %s248
      %s263 = sphi 0, %s249
      %s267 = sphi 0, %s267
      %s269 = sphi 0, %s267
      %s270 = sphi 0, %s269
      %s284 = sphi 0, %s270
      %s288 = sphi 0, %s288
      %s290 = sphi 0, %s288
      %s291 = sphi 0, %s290
      %s305 = sphi 0, %s291
      %s309 = sphi 0, %s309
      %s311 = sphi 0, %s309
      %s312 = sphi 0, %s311
      %s326 = sphi 0, %s312
      %s330 = sphi 0, %s330
      %s332 = sphi 0, %s330
      %s333 = sphi 0, %s332
      %s347 = sphi 0, %s333
      %s353 = sphi 0, %s355
      %s356 = sphi 0, %s353
      %s357 = sphi 0, %s356
      %s373 = sphi 0, %s357
      %s379 = sphi 0, %s381
      %s382 = sphi 0, %s379
      %s383 = sphi 0, %s382
      %s399 = sphi 0, %s383
      %s405 = sphi 0, %s407
      %s408 = sphi 0, %s405
      %s409 = sphi 0, %s408
      %s425 = sphi 0, %s409
      %s431 = sphi 0, %s433
      %s434 = sphi 0, %s431
      %s435 = sphi 0, %s434
      %s451 = sphi 0, %s435
      %s457 = sphi 0, %s459
      %s460 = sphi 0, %s457
      %s461 = sphi 0, %s460
      %s477 = sphi 0, %s461
    $region4: #{mhp_fused_forward.1} parent=1 // loop_header_branch
      %37 = sbr.rel (%p35) target = $region8
    $region5: #{mhp_fused_forward.1} parent=1 // loop_body
      %s39 = ssub.s32 %s34, 1
      %s40 = ssub.s32 %s34, 2
      %s41 = sadd.s32 %s34, 1
      %s42 = ssub.s32 %s34, %s41
      %p43 = scmp.eq.s32.totalorder %s42, 0
      %s45 = sadd.s32 %s44, 1
      %s46 = scalar_select %p43, %s44, %s45
      %p49 = pneg %p43
      %p50 = scmp.eq.s32.totalorder %s34, 1
      %p51 = por %p49, %p50
      %p52 = scmp.ne.s32.totalorder %s44, %s47
      %p53 = scmp.eq.s32.totalorder %s34, 0
      %p54 = por %p52, %p53
      %p55 = scmp.ne.s32.totalorder %s44, %s47
      %p56 = scmp.eq.s32.totalorder %s39, 1
      %p57 = por %p55, %p56
      %p58 = scmp.ne.s32.totalorder %s47, %s48
      %p59 = scmp.eq.s32.totalorder %s39, 0
      %p60 = por %p58, %p59
      %p61 = scmp.ne.s32.totalorder %s47, %s48
      %p62 = scmp.eq.s32.totalorder %s40, 1
      %p63 = por %p61, %p62
      %p65 = scmp.ne.s32.totalorder %s48, %s64
      %p66 = scmp.eq.s32.totalorder %s40, 0
      %p67 = por %p65, %p66
      %s68 = ssub.s32 %s34, %s41
      %p69 = scmp.eq.s32.totalorder %s68, 0
      %s71 = sadd.s32 %s70, 1
      %s72 = scalar_select %p69, %s70, %s71
      %p75 = pneg %p69
      %p76 = scmp.eq.s32.totalorder %s34, 1
      %p77 = por %p75, %p76
      %p78 = scmp.ne.s32.totalorder %s70, %s73
      %p79 = scmp.eq.s32.totalorder %s34, 0
      %p80 = por %p78, %p79
      %p81 = scmp.ne.s32.totalorder %s70, %s73
      %p82 = scmp.eq.s32.totalorder %s39, 1
      %p83 = por %p81, %p82
      %p84 = scmp.ne.s32.totalorder %s73, %s74
      %p85 = scmp.eq.s32.totalorder %s39, 0
      %p86 = por %p84, %p85
      %p87 = scmp.ne.s32.totalorder %s73, %s74
      %p88 = scmp.eq.s32.totalorder %s40, 1
      %p89 = por %p87, %p88
      %p91 = scmp.ne.s32.totalorder %s74, %s90
      %p92 = scmp.eq.s32.totalorder %s40, 0
      %p93 = por %p91, %p92
      %s94 = ssub.s32 %s34, %s41
      %p95 = scmp.eq.s32.totalorder %s94, 0
      %s97 = sadd.s32 %s96, 1
      %s98 = scalar_select %p95, %s96, %s97
      %p101 = pneg %p95
      %p102 = scmp.eq.s32.totalorder %s34, 1
      %p103 = por %p101, %p102
      %p104 = scmp.ne.s32.totalorder %s96, %s99
      %p105 = scmp.eq.s32.totalorder %s34, 0
      %p106 = por %p104, %p105
      %p107 = scmp.ne.s32.totalorder %s96, %s99
      %p108 = scmp.eq.s32.totalorder %s39, 1
      %p109 = por %p107, %p108
      %p110 = scmp.ne.s32.totalorder %s99, %s100
      %p111 = scmp.eq.s32.totalorder %s39, 0
      %p112 = por %p110, %p111
      %p113 = scmp.ne.s32.totalorder %s99, %s100
      %p114 = scmp.eq.s32.totalorder %s40, 1
      %p115 = por %p113, %p114
      %p117 = scmp.ne.s32.totalorder %s100, %s116
      %p118 = scmp.eq.s32.totalorder %s40, 0
      %p119 = por %p117, %p118
      %s121 = sadd.s32 %s120, 1
      %p124 = scmp.eq.s32.totalorder %s34, 1
      %p125 = scmp.ne.s32.totalorder %s120, %s122
      %p126 = scmp.eq.s32.totalorder %s34, 0
      %p127 = por %p125, %p126
      %p128 = scmp.ne.s32.totalorder %s120, %s122
      %p129 = scmp.eq.s32.totalorder %s39, 1
      %p130 = por %p128, %p129
      %p131 = scmp.ne.s32.totalorder %s122, %s123
      %p132 = scmp.eq.s32.totalorder %s39, 0
      %p133 = por %p131, %p132
      %p134 = scmp.ne.s32.totalorder %s122, %s123
      %p135 = scmp.eq.s32.totalorder %s40, 1
      %p136 = por %p134, %p135
      %p138 = scmp.ne.s32.totalorder %s123, %s137
      %p139 = scmp.eq.s32.totalorder %s40, 0
      %p140 = por %p138, %p139
      %s142 = sadd.s32 %s141, 1
      %p145 = scmp.eq.s32.totalorder %s34, 1
      %p146 = scmp.ne.s32.totalorder %s141, %s143
      %p147 = scmp.eq.s32.totalorder %s34, 0
      %p148 = por %p146, %p147
      %p149 = scmp.ne.s32.totalorder %s141, %s143
      %p150 = scmp.eq.s32.totalorder %s39, 1
      %p151 = por %p149, %p150
      %p152 = scmp.ne.s32.totalorder %s143, %s144
      %p153 = scmp.eq.s32.totalorder %s39, 0
      %p154 = por %p152, %p153
      %p155 = scmp.ne.s32.totalorder %s143, %s144
      %p156 = scmp.eq.s32.totalorder %s40, 1
      %p157 = por %p155, %p156
      %p159 = scmp.ne.s32.totalorder %s144, %s158
      %p160 = scmp.eq.s32.totalorder %s40, 0
      %p161 = por %p159, %p160
      %s163 = sadd.s32 %s162, 1
      %p166 = scmp.eq.s32.totalorder %s34, 1
      %p167 = scmp.ne.s32.totalorder %s162, %s164
      %p168 = scmp.eq.s32.totalorder %s34, 0
      %p169 = por %p167, %p168
      %p170 = scmp.ne.s32.totalorder %s162, %s164
      %p171 = scmp.eq.s32.totalorder %s39, 1
      %p172 = por %p170, %p171
      %p173 = scmp.ne.s32.totalorder %s164, %s165
      %p174 = scmp.eq.s32.totalorder %s39, 0
      %p175 = por %p173, %p174
      %p176 = scmp.ne.s32.totalorder %s164, %s165
      %p177 = scmp.eq.s32.totalorder %s40, 1
      %p178 = por %p176, %p177
      %p180 = scmp.ne.s32.totalorder %s165, %s179
      %p181 = scmp.eq.s32.totalorder %s40, 0
      %p182 = por %p180, %p181
      %s184 = sadd.s32 %s183, 1
      %p187 = scmp.eq.s32.totalorder %s34, 1
      %p188 = scmp.ne.s32.totalorder %s183, %s185
      %p189 = scmp.eq.s32.totalorder %s34, 0
      %p190 = por %p188, %p189
      %p191 = scmp.ne.s32.totalorder %s183, %s185
      %p192 = scmp.eq.s32.totalorder %s39, 1
      %p193 = por %p191, %p192
      %p194 = scmp.ne.s32.totalorder %s185, %s186
      %p195 = scmp.eq.s32.totalorder %s39, 0
      %p196 = por %p194, %p195
      %p197 = scmp.ne.s32.totalorder %s185, %s186
      %p198 = scmp.eq.s32.totalorder %s40, 1
      %p199 = por %p197, %p198
      %p201 = scmp.ne.s32.totalorder %s186, %s200
      %p202 = scmp.eq.s32.totalorder %s40, 0
      %p203 = por %p201, %p202
      %s205 = sadd.s32 %s204, 1
      %p208 = scmp.eq.s32.totalorder %s34, 1
      %p209 = scmp.ne.s32.totalorder %s204, %s206
      %p210 = scmp.eq.s32.totalorder %s34, 0
      %p211 = por %p209, %p210
      %p212 = scmp.ne.s32.totalorder %s204, %s206
      %p213 = scmp.eq.s32.totalorder %s39, 1
      %p214 = por %p212, %p213
      %p215 = scmp.ne.s32.totalorder %s206, %s207
      %p216 = scmp.eq.s32.totalorder %s39, 0
      %p217 = por %p215, %p216
      %p218 = scmp.ne.s32.totalorder %s206, %s207
      %p219 = scmp.eq.s32.totalorder %s40, 1
      %p220 = por %p218, %p219
      %p222 = scmp.ne.s32.totalorder %s207, %s221
      %p223 = scmp.eq.s32.totalorder %s40, 0
      %p224 = por %p222, %p223
      %s226 = sadd.s32 %s225, 1
      %p229 = scmp.eq.s32.totalorder %s34, 1
      %p230 = scmp.ne.s32.totalorder %s225, %s227
      %p231 = scmp.eq.s32.totalorder %s34, 0
      %p232 = por %p230, %p231
      %p233 = scmp.ne.s32.totalorder %s225, %s227
      %p234 = scmp.eq.s32.totalorder %s39, 1
      %p235 = por %p233, %p234
      %p236 = scmp.ne.s32.totalorder %s227, %s228
      %p237 = scmp.eq.s32.totalorder %s39, 0
      %p238 = por %p236, %p237
      %p239 = scmp.ne.s32.totalorder %s227, %s228
      %p240 = scmp.eq.s32.totalorder %s40, 1
      %p241 = por %p239, %p240
      %p243 = scmp.ne.s32.totalorder %s228, %s242
      %p244 = scmp.eq.s32.totalorder %s40, 0
      %p245 = por %p243, %p244
      %s247 = sadd.s32 %s246, 1
      %p250 = scmp.eq.s32.totalorder %s34, 1
      %p251 = scmp.ne.s32.totalorder %s246, %s248
      %p252 = scmp.eq.s32.totalorder %s34, 0
      %p253 = por %p251, %p252
      %p254 = scmp.ne.s32.totalorder %s246, %s248
      %p255 = scmp.eq.s32.totalorder %s39, 1
      %p256 = por %p254, %p255
      %p257 = scmp.ne.s32.totalorder %s248, %s249
      %p258 = scmp.eq.s32.totalorder %s39, 0
      %p259 = por %p257, %p258
      %p260 = scmp.ne.s32.totalorder %s248, %s249
      %p261 = scmp.eq.s32.totalorder %s40, 1
      %p262 = por %p260, %p261
      %p264 = scmp.ne.s32.totalorder %s249, %s263
      %p265 = scmp.eq.s32.totalorder %s40, 0
      %p266 = por %p264, %p265
      %s268 = sadd.s32 %s267, 1
      %p271 = scmp.eq.s32.totalorder %s34, 1
      %p272 = scmp.ne.s32.totalorder %s267, %s269
      %p273 = scmp.eq.s32.totalorder %s34, 0
      %p274 = por %p272, %p273
      %p275 = scmp.ne.s32.totalorder %s267, %s269
      %p276 = scmp.eq.s32.totalorder %s39, 1
      %p277 = por %p275, %p276
      %p278 = scmp.ne.s32.totalorder %s269, %s270
      %p279 = scmp.eq.s32.totalorder %s39, 0
      %p280 = por %p278, %p279
      %p281 = scmp.ne.s32.totalorder %s269, %s270
      %p282 = scmp.eq.s32.totalorder %s40, 1
      %p283 = por %p281, %p282
      %p285 = scmp.ne.s32.totalorder %s270, %s284
      %p286 = scmp.eq.s32.totalorder %s40, 0
      %p287 = por %p285, %p286
      %s289 = sadd.s32 %s288, 1
      %p292 = scmp.eq.s32.totalorder %s34, 1
      %p293 = scmp.ne.s32.totalorder %s288, %s290
      %p294 = scmp.eq.s32.totalorder %s34, 0
      %p295 = por %p293, %p294
      %p296 = scmp.ne.s32.totalorder %s288, %s290
      %p297 = scmp.eq.s32.totalorder %s39, 1
      %p298 = por %p296, %p297
      %p299 = scmp.ne.s32.totalorder %s290, %s291
      %p300 = scmp.eq.s32.totalorder %s39, 0
      %p301 = por %p299, %p300
      %p302 = scmp.ne.s32.totalorder %s290, %s291
      %p303 = scmp.eq.s32.totalorder %s40, 1
      %p304 = por %p302, %p303
      %p306 = scmp.ne.s32.totalorder %s291, %s305
      %p307 = scmp.eq.s32.totalorder %s40, 0
      %p308 = por %p306, %p307
      %s310 = sadd.s32 %s309, 1
      %p313 = scmp.eq.s32.totalorder %s34, 1
      %p314 = scmp.ne.s32.totalorder %s309, %s311
      %p315 = scmp.eq.s32.totalorder %s34, 0
      %p316 = por %p314, %p315
      %p317 = scmp.ne.s32.totalorder %s309, %s311
      %p318 = scmp.eq.s32.totalorder %s39, 1
      %p319 = por %p317, %p318
      %p320 = scmp.ne.s32.totalorder %s311, %s312
      %p321 = scmp.eq.s32.totalorder %s39, 0
      %p322 = por %p320, %p321
      %p323 = scmp.ne.s32.totalorder %s311, %s312
      %p324 = scmp.eq.s32.totalorder %s40, 1
      %p325 = por %p323, %p324
      %p327 = scmp.ne.s32.totalorder %s312, %s326
      %p328 = scmp.eq.s32.totalorder %s40, 0
      %p329 = por %p327, %p328
      %s331 = sadd.s32 %s330, 1
      %p334 = scmp.eq.s32.totalorder %s34, 1
      %p335 = scmp.ne.s32.totalorder %s330, %s332
      %p336 = scmp.eq.s32.totalorder %s34, 0
      %p337 = por %p335, %p336
      %p338 = scmp.ne.s32.totalorder %s330, %s332
      %p339 = scmp.eq.s32.totalorder %s39, 1
      %p340 = por %p338, %p339
      %p341 = scmp.ne.s32.totalorder %s332, %s333
      %p342 = scmp.eq.s32.totalorder %s39, 0
      %p343 = por %p341, %p342
      %p344 = scmp.ne.s32.totalorder %s332, %s333
      %p345 = scmp.eq.s32.totalorder %s40, 1
      %p346 = por %p344, %p345
      %p348 = scmp.ne.s32.totalorder %s333, %s347
      %p349 = scmp.eq.s32.totalorder %s40, 0
      %p350 = por %p348, %p349
      %s351 = ssub.s32 %s34, %s41
      %p352 = scmp.eq.s32.totalorder %s351, 0
      %s354 = sadd.s32 %s353, 1
      %s355 = scalar_select %p352, %s353, %s354
      %p358 = pneg %p352
      %p359 = scmp.eq.s32.totalorder %s34, 1
      %p360 = por %p358, %p359
      %p361 = scmp.ne.s32.totalorder %s353, %s356
      %p362 = scmp.eq.s32.totalorder %s34, 0
      %p363 = por %p361, %p362
      %p364 = scmp.ne.s32.totalorder %s353, %s356
      %p365 = scmp.eq.s32.totalorder %s39, 1
      %p366 = por %p364, %p365
      %p367 = scmp.ne.s32.totalorder %s356, %s357
      %p368 = scmp.eq.s32.totalorder %s39, 0
      %p369 = por %p367, %p368
      %p370 = scmp.ne.s32.totalorder %s356, %s357
      %p371 = scmp.eq.s32.totalorder %s40, 1
      %p372 = por %p370, %p371
      %p374 = scmp.ne.s32.totalorder %s357, %s373
      %p375 = scmp.eq.s32.totalorder %s40, 0
      %p376 = por %p374, %p375
      %s377 = ssub.s32 %s34, %s41
      %p378 = scmp.eq.s32.totalorder %s377, 0
      %s380 = sadd.s32 %s379, 1
      %s381 = scalar_select %p378, %s379, %s380
      %p384 = pneg %p378
      %p385 = scmp.eq.s32.totalorder %s34, 1
      %p386 = por %p384, %p385
      %p387 = scmp.ne.s32.totalorder %s379, %s382
      %p388 = scmp.eq.s32.totalorder %s34, 0
      %p389 = por %p387, %p388
      %p390 = scmp.ne.s32.totalorder %s379, %s382
      %p391 = scmp.eq.s32.totalorder %s39, 1
      %p392 = por %p390, %p391
      %p393 = scmp.ne.s32.totalorder %s382, %s383
      %p394 = scmp.eq.s32.totalorder %s39, 0
      %p395 = por %p393, %p394
      %p396 = scmp.ne.s32.totalorder %s382, %s383
      %p397 = scmp.eq.s32.totalorder %s40, 1
      %p398 = por %p396, %p397
      %p400 = scmp.ne.s32.totalorder %s383, %s399
      %p401 = scmp.eq.s32.totalorder %s40, 0
      %p402 = por %p400, %p401
      %s403 = ssub.s32 %s34, %s41
      %p404 = scmp.eq.s32.totalorder %s403, 0
      %s406 = sadd.s32 %s405, 1
      %s407 = scalar_select %p404, %s405, %s406
      %p410 = pneg %p404
      %p411 = scmp.eq.s32.totalorder %s34, 1
      %p412 = por %p410, %p411
      %p413 = scmp.ne.s32.totalorder %s405, %s408
      %p414 = scmp.eq.s32.totalorder %s34, 0
      %p415 = por %p413, %p414
      %p416 = scmp.ne.s32.totalorder %s405, %s408
      %p417 = scmp.eq.s32.totalorder %s39, 1
      %p418 = por %p416, %p417
      %p419 = scmp.ne.s32.totalorder %s408, %s409
      %p420 = scmp.eq.s32.totalorder %s39, 0
      %p421 = por %p419, %p420
      %p422 = scmp.ne.s32.totalorder %s408, %s409
      %p423 = scmp.eq.s32.totalorder %s40, 1
      %p424 = por %p422, %p423
      %p426 = scmp.ne.s32.totalorder %s409, %s425
      %p427 = scmp.eq.s32.totalorder %s40, 0
      %p428 = por %p426, %p427
      %s429 = ssub.s32 %s34, %s41
      %p430 = scmp.eq.s32.totalorder %s429, 0
      %s432 = sadd.s32 %s431, 1
      %s433 = scalar_select %p430, %s431, %s432
      %p436 = pneg %p430
      %p437 = scmp.eq.s32.totalorder %s34, 1
      %p438 = por %p436, %p437
      %p439 = scmp.ne.s32.totalorder %s431, %s434
      %p440 = scmp.eq.s32.totalorder %s34, 0
      %p441 = por %p439, %p440
      %p442 = scmp.ne.s32.totalorder %s431, %s434
      %p443 = scmp.eq.s32.totalorder %s39, 1
      %p444 = por %p442, %p443
      %p445 = scmp.ne.s32.totalorder %s434, %s435
      %p446 = scmp.eq.s32.totalorder %s39, 0
      %p447 = por %p445, %p446
      %p448 = scmp.ne.s32.totalorder %s434, %s435
      %p449 = scmp.eq.s32.totalorder %s40, 1
      %p450 = por %p448, %p449
      %p452 = scmp.ne.s32.totalorder %s435, %s451
      %p453 = scmp.eq.s32.totalorder %s40, 0
      %p454 = por %p452, %p453
      %s455 = ssub.s32 %s34, %s41
      %p456 = scmp.eq.s32.totalorder %s455, 0
      %s458 = sadd.s32 %s457, 1
      %s459 = scalar_select %p456, %s457, %s458
      %p462 = pneg %p456
      %p463 = scmp.eq.s32.totalorder %s34, 1
      %p464 = por %p462, %p463
      %p465 = scmp.ne.s32.totalorder %s457, %s460
      %p466 = scmp.eq.s32.totalorder %s34, 0
      %p467 = por %p465, %p466
      %p468 = scmp.ne.s32.totalorder %s457, %s460
      %p469 = scmp.eq.s32.totalorder %s39, 1
      %p470 = por %p468, %p469
      %p471 = scmp.ne.s32.totalorder %s460, %s461
      %p472 = scmp.eq.s32.totalorder %s39, 0
      %p473 = por %p471, %p472
      %p474 = scmp.ne.s32.totalorder %s460, %s461
      %p475 = scmp.eq.s32.totalorder %s40, 1
      %p476 = por %p474, %p475
      %p478 = scmp.ne.s32.totalorder %s461, %s477
      %p479 = scmp.eq.s32.totalorder %s40, 0
      %p480 = por %p478, %p479
      %p481 = scmp.le.s32.totalorder 1, %s34
      %p482 = scmp.lt.s32.totalorder %s34, 3
      %p483 = pnand %p481, %p482
      %p484 = pneg %p483
      // Predicated region
      $region9: #{mhp_fused_forward.1} parent=5 // pred_check
        _
      $region10: #{mhp_fused_forward.1} parent=5 // pred_check_branch
        %486 = sbr.rel (%p483) target = $region12
      $region11: #{mhp_fused_forward.1} parent=5 // pred_region
        %s487 = ssub.s32 %s34, 1
        // Predicated region
        $region13: #{mhp_fused_forward.1} parent=11 // pred_check
          %p488 = pneg %p133
        $region14: #{mhp_fused_forward.1} parent=11 // pred_check_branch
          %490 = sbr.rel (%p488) target = $region16
        $region15: #{mhp_fused_forward.1} parent=11 // pred_region
          _
        $region16: #{mhp_fused_forward.1} parent=11 // pred_fallthru
          _
        // Predicated region
        $region17: #{mhp_fused_forward.1} parent=11 // pred_check
          %p491 = pneg %p154
        $region18: #{mhp_fused_forward.1} parent=11 // pred_check_branch
          %493 = sbr.rel (%p491) target = $region20
        $region19: #{mhp_fused_forward.1} parent=11 // pred_region
          _
        $region20: #{mhp_fused_forward.1} parent=11 // pred_fallthru
          _
        // Predicated region
        $region21: #{mhp_fused_forward.1} parent=11 // pred_check
          %p494 = pneg %p175
        $region22: #{mhp_fused_forward.1} parent=11 // pred_check_branch
          %496 = sbr.rel (%p494) target = $region24
        $region23: #{mhp_fused_forward.1} parent=11 // pred_region
          _
        $region24: #{mhp_fused_forward.1} parent=11 // pred_fallthru
          _
        // Predicated region
        $region25: #{mhp_fused_forward.1} parent=11 // pred_check
          %p497 = pneg %p196
        $region26: #{mhp_fused_forward.1} parent=11 // pred_check_branch
          %499 = sbr.rel (%p497) target = $region28
        $region27: #{mhp_fused_forward.1} parent=11 // pred_region
          _
        $region28: #{mhp_fused_forward.1} parent=11 // pred_fallthru
          _
        // Predicated region
        $region29: #{mhp_fused_forward.1} parent=11 // pred_check
          %p500 = pneg %p217
        $region30: #{mhp_fused_forward.1} parent=11 // pred_check_branch
          %502 = sbr.rel (%p500) target = $region32
        $region31: #{mhp_fused_forward.1} parent=11 // pred_region
          _
        $region32: #{mhp_fused_forward.1} parent=11 // pred_fallthru
          _
        // Predicated region
        $region33: #{mhp_fused_forward.1} parent=11 // pred_check
          %p503 = pneg %p238
        $region34: #{mhp_fused_forward.1} parent=11 // pred_check_branch
          %505 = sbr.rel (%p503) target = $region36
        $region35: #{mhp_fused_forward.1} parent=11 // pred_region
          _
        $region36: #{mhp_fused_forward.1} parent=11 // pred_fallthru
          _
        // Predicated region
        $region37: #{mhp_fused_forward.1} parent=11 // pred_check
          %p506 = pneg %p259
        $region38: #{mhp_fused_forward.1} parent=11 // pred_check_branch
          %508 = sbr.rel (%p506) target = $region40
        $region39: #{mhp_fused_forward.1} parent=11 // pred_region
          _
        $region40: #{mhp_fused_forward.1} parent=11 // pred_fallthru
          _
        // Predicated region
        $region41: #{mhp_fused_forward.1} parent=11 // pred_check
          %p509 = pneg %p280
        $region42: #{mhp_fused_forward.1} parent=11 // pred_check_branch
          %511 = sbr.rel (%p509) target = $region44
        $region43: #{mhp_fused_forward.1} parent=11 // pred_region
          _
        $region44: #{mhp_fused_forward.1} parent=11 // pred_fallthru
          _
        // Predicated region
        $region45: #{mhp_fused_forward.1} parent=11 // pred_check
          %p512 = pneg %p301
        $region46: #{mhp_fused_forward.1} parent=11 // pred_check_branch
          %514 = sbr.rel (%p512) target = $region48
        $region47: #{mhp_fused_forward.1} parent=11 // pred_region
          _
        $region48: #{mhp_fused_forward.1} parent=11 // pred_fallthru
          _
        // Predicated region
        $region49: #{mhp_fused_forward.1} parent=11 // pred_check
          %p515 = pneg %p322
        $region50: #{mhp_fused_forward.1} parent=11 // pred_check_branch
          %517 = sbr.rel (%p515) target = $region52
        $region51: #{mhp_fused_forward.1} parent=11 // pred_region
          _
        $region52: #{mhp_fused_forward.1} parent=11 // pred_fallthru
          _
        // Predicated region
        $region53: #{mhp_fused_forward.1} parent=11 // pred_check
          %p518 = pneg %p343
        $region54: #{mhp_fused_forward.1} parent=11 // pred_check_branch
          %520 = sbr.rel (%p518) target = $region56
        $region55: #{mhp_fused_forward.1} parent=11 // pred_region
          _
        $region56: #{mhp_fused_forward.1} parent=11 // pred_fallthru
          _
      $region12: #{mhp_fused_forward.1} parent=5 // pred_fallthru
        _
      %p521 = scmp.lt.s32.totalorder %s34, 2
      // Predicated region
      $region57: #{mhp_fused_forward.1} parent=5 // pred_check
        %p522 = pneg %p521
      $region58: #{mhp_fused_forward.1} parent=5 // pred_check_branch
        %524 = sbr.rel (%p522) target = $region60
      $region59: #{mhp_fused_forward.1} parent=5 // pred_region
        // Predicated region
        $region61: #{mhp_fused_forward.1} parent=59 // pred_check
          %p525 = pneg %p54
        $region62: #{mhp_fused_forward.1} parent=59 // pred_check_branch
          %527 = sbr.rel (%p525) target = $region64
        $region63: #{mhp_fused_forward.1} parent=59 // pred_region
          %p528 = scmp.lt.s32.totalorder %s34, 1
          %s529 = scalar_select %p528, %s34, 1
          %s530 = smul.addr %s529, 8
          %s531 = scalar_lea.vmem %s0, %s530
        $region64: #{mhp_fused_forward.1} parent=59 // pred_fallthru
          _
        // Predicated region
        $region65: #{mhp_fused_forward.1} parent=59 // pred_check
          %p532 = pneg %p80
        $region66: #{mhp_fused_forward.1} parent=59 // pred_check_branch
          %534 = sbr.rel (%p532) target = $region68
        $region67: #{mhp_fused_forward.1} parent=59 // pred_region
          %p535 = scmp.lt.s32.totalorder %s34, 1
          %s536 = scalar_select %p535, %s34, 1
          %s537 = smul.addr %s536, 8
          %s538 = scalar_lea.vmem %s1, %s537
        $region68: #{mhp_fused_forward.1} parent=59 // pred_fallthru
          _
        // Predicated region
        $region69: #{mhp_fused_forward.1} parent=59 // pred_check
          %p539 = pneg %p106
        $region70: #{mhp_fused_forward.1} parent=59 // pred_check_branch
          %541 = sbr.rel (%p539) target = $region72
        $region71: #{mhp_fused_forward.1} parent=59 // pred_region
          %p542 = scmp.lt.s32.totalorder %s34, 1
          %s543 = scalar_select %p542, %s34, 1
          %s544 = smul.addr %s543, 16
          %s545 = smul.addr %s544, 8
          %s546 = scalar_lea.vmem %s2, %s545
        $region72: #{mhp_fused_forward.1} parent=59 // pred_fallthru
          _
      $region60: #{mhp_fused_forward.1} parent=5 // pred_fallthru
        _
      %p547 = scmp.le.s32.totalorder 1, %s34
      %p548 = scmp.lt.s32.totalorder %s34, 3
      %p549 = pnand %p547, %p548
      %p550 = pneg %p549
      // Predicated region
      $region73: #{mhp_fused_forward.1} parent=5 // pred_check
        _
      $region74: #{mhp_fused_forward.1} parent=5 // pred_check_branch
        %552 = sbr.rel (%p549) target = $region76
      $region75: #{mhp_fused_forward.1} parent=5 // pred_region
        %s553 = ssub.s32 %s34, 1
        %p554 = scmp.lt.s32.totalorder %s39, 1
        %s555 = scalar_select %p554, %s39, 1
        %s556 = smul.addr %s555, 8
        %s557 = scalar_lea.vmem %s0, %s556
        %p558 = pneg %p60
        %p559 = pneg %p57
        %p560 = scmp.lt.s32.totalorder %s39, 1
        %s561 = scalar_select %p560, %s39, 1
        %s562 = smul.addr %s561, 8
        %s563 = scalar_lea.vmem %s1, %s562
        %p564 = pneg %p86
        %p565 = pneg %p83
        %p566 = scmp.lt.s32.totalorder %s39, 1
        %s567 = scalar_select %p566, %s39, 1
        %s568 = smul.addr %s567, 16
        %s569 = smul.addr %s568, 8
        %s570 = scalar_lea.vmem %s2, %s569
        %p571 = pneg %p112
        %p572 = pneg %p109
        %p573 = pneg %p133
        %p574 = pneg %p130
        %p575 = pneg %p154
        %p576 = pneg %p151
        %p577 = pneg %p175
        %p578 = pneg %p172
        %p579 = pneg %p196
        %p580 = pneg %p193
        %p581 = pneg %p217
        %p582 = pneg %p214
        %p583 = pneg %p238
        %p584 = pneg %p235
        %p585 = pneg %p259
        %p586 = pneg %p256
        %p587 = pneg %p280
        %p588 = pneg %p277
        %p589 = pneg %p301
        %p590 = pneg %p298
        %p591 = pneg %p322
        %p592 = pneg %p319
        %p593 = pneg %p343
        %p594 = pneg %p340
        %p595 = pneg %p369
        %p596 = pneg %p366
        %s597 = sand.u32 %s356, 1
        %s598 = scalar_lea.sflag [#allocation3], %s597
        %s599 = sand.u32 %s356, 1
        %s600 = smul.addr %s599, 8
        %s601 = scalar_lea.vmem [#allocation2], %s600
        %p602 = pneg %p395
        %p603 = pneg %p392
        %s604 = sand.u32 %s39, 1
        %s605 = scalar_lea.sflag [#allocation5], %s604
        %s606 = sand.u32 %s382, 1
        %s607 = scalar_lea.vmem [#allocation4], %s606
        %p608 = pneg %p421
        %p609 = pneg %p418
        %s610 = sand.u32 %s39, 1
        %s611 = scalar_lea.sflag [#allocation5], %s610
        %s612 = sand.u32 %s408, 1
        %s613 = smul.addr %s612, 8
        %s614 = scalar_lea.vmem [#allocation6], %s613
        %p615 = pneg %p447
        %p616 = pneg %p444
        %s617 = sand.u32 %s434, 1
        %s618 = scalar_lea.sflag [#allocation8], %s617
        %s619 = sand.u32 %s434, 1
        %s620 = smul.addr %s619, 8
        %s621 = scalar_lea.vmem [#allocation7], %s620
        %p622 = pneg %p473
        %p623 = pneg %p470
        %p624 = scmp.lt.s32.totalorder %s39, 1
        %s625 = scalar_select %p624, %s39, 1
        %s626 = scalar_lea.vmem %s18, %s625
        %p627 = scmp.lt.s32.totalorder %s39, 1
        %s628 = scalar_select %p627, %s39, 1
        %s629 = smul.addr %s628, 8
        %s630 = scalar_lea.vmem %s0, %s629
        %p631 = scmp.lt.s32.totalorder %s39, 1
        %s632 = scalar_select %p631, %s39, 1
        %s633 = smul.addr %s632, 8
        %s634 = scalar_lea.vmem %s1, %s633
        %p635 = scmp.lt.s32.totalorder %s39, 1
        %s636 = scalar_select %p635, %s39, 1
        %s637 = smul.addr %s636, 16
        %s638 = smul.addr %s637, 8
        %s639 = scalar_lea.vmem %s2, %s638
        %p640 = scmp.lt.s32.totalorder %s39, 1
        %s641 = scalar_select %p640, %s39, 1
        %s642 = scalar_lea.vmem %s18, %s641
        %v644 = vld [vmem:[%s630] sm:$0xff]
        %v645 = vld [vmem:[%s3] sm:$0xff]
        %v646 = vld [vmem:[%s3 + $0x8] sm:$0xff]
        %v647 = vpack.c.bf16 %v644, %v644
        %v648 = vpack.c.bf16 %v646, %v645
        %v649 = vld [vmem:[%s634] sm:$0xff]
        %v650 = vld [vmem:[%s4] sm:$0xff]
        %v651 = vld [vmem:[%s4 + $0x8] sm:$0xff]
        %v652 = vpack.c.bf16 %v649, %v649
        %v653 = vpack.c.bf16 %v651, %v650
        %vm654 = vcmask 130048
        %v656 = vsel %vm654, %v652, 0
        %658 = vmatprep.subr.bf16.mxu0 0
        %659 = vmatpush1.bf16.msra.mxu0 %v653
        %660 = vmatprep.subr.bf16.mxu0 0
        %661 = vmatpush1.bf16.msra.mxu0 0
        %662 = vmatprep.subr.bf16.mxu0 0
        %663 = vmatpush1.bf16.msra.mxu0 0
        %664 = vmatprep.subr.bf16.mxu0 0
        %665 = vmatpush1.bf16.msra.mxu0 0
        %666 = vmatprep.subr.bf16.mxu0 0
        %667 = vmatpush1.bf16.msra.mxu0 0
        %668 = vmatprep.subr.bf16.mxu0 0
        %669 = vmatpush1.bf16.msra.mxu0 0
        %670 = vmatprep.subr.bf16.mxu0 0
        %671 = vmatpush1.bf16.msra.mxu0 0
        %672 = vmatprep.subr.bf16.mxu0 0
        %673 = vmatpush1.bf16.msra.mxu0 0
        %674 = vmatprep.subr.bf16.mxu0 0
        %675 = vmatpush1.bf16.msra.mxu0 0
        %676 = vmatprep.subr.bf16.mxu0 0
        %677 = vmatpush1.bf16.msra.mxu0 0
        %678 = vmatprep.subr.bf16.mxu0 0
        %679 = vmatpush1.bf16.msra.mxu0 0
        %680 = vmatprep.subr.bf16.mxu0 0
        %681 = vmatpush1.bf16.msra.mxu0 0
        %682 = vmatprep.subr.bf16.mxu0 0
        %683 = vmatpush1.bf16.msra.mxu0 0
        %684 = vmatprep.subr.bf16.mxu0 0
        %685 = vmatpush1.bf16.msra.mxu0 0
        %686 = vmatprep.subr.bf16.mxu0 0
        %687 = vmatpush1.bf16.msra.mxu0 0
        %688 = vmatprep.subr.bf16.mxu0 0
        %689 = vmatpush1.bf16.msra.mxu0 0
        %690 = vmatprep.mubr.bf16.mxu0 0
        %691 = vmatmul.mubr.bf16.gmra.mrb[0].mxu0 %v656
        %v692 = vpop.f32.mrb[0].mxu0
        %v693 = vadd.f32 0.0, %v692
        %v694 = vpop.f32.mrb[0].mxu0
        %v695 = vpop.f32.mrb[0].mxu0
        %v696 = vpop.f32.mrb[0].mxu0
        %697 = vdwg.mxu0
        %v699 = vsel %vm654, %v647, 0
        %701 = vmatprep.subr.bf16.mxu0 0
        %702 = vmatpush1.bf16.msra.mxu0 %v648
        %703 = vmatprep.subr.bf16.mxu0 0
        %704 = vmatpush1.bf16.msra.mxu0 0
        %705 = vmatprep.subr.bf16.mxu0 0
        %706 = vmatpush1.bf16.msra.mxu0 0
        %707 = vmatprep.subr.bf16.mxu0 0
        %708 = vmatpush1.bf16.msra.mxu0 0
        %709 = vmatprep.subr.bf16.mxu0 0
        %710 = vmatpush1.bf16.msra.mxu0 0
        %711 = vmatprep.subr.bf16.mxu0 0
        %712 = vmatpush1.bf16.msra.mxu0 0
        %713 = vmatprep.subr.bf16.mxu0 0
        %714 = vmatpush1.bf16.msra.mxu0 0
        %715 = vmatprep.subr.bf16.mxu0 0
        %716 = vmatpush1.bf16.msra.mxu0 0
        %717 = vmatprep.subr.bf16.mxu0 0
        %718 = vmatpush1.bf16.msra.mxu0 0
        %719 = vmatprep.subr.bf16.mxu0 0
        %720 = vmatpush1.bf16.msra.mxu0 0
        %721 = vmatprep.subr.bf16.mxu0 0
        %722 = vmatpush1.bf16.msra.mxu0 0
        %723 = vmatprep.subr.bf16.mxu0 0
        %724 = vmatpush1.bf16.msra.mxu0 0
        %725 = vmatprep.subr.bf16.mxu0 0
        %726 = vmatpush1.bf16.msra.mxu0 0
        %727 = vmatprep.subr.bf16.mxu0 0
        %728 = vmatpush1.bf16.msra.mxu0 0
        %729 = vmatprep.subr.bf16.mxu0 0
        %730 = vmatpush1.bf16.msra.mxu0 0
        %731 = vmatprep.subr.bf16.mxu0 0
        %732 = vmatpush1.bf16.msra.mxu0 0
        %733 = vmatprep.mubr.bf16.mxu0 0
        %734 = vmatmul.mubr.bf16.gmra.mrb[0].mxu0 %v699
        %v735 = vpop.f32.mrb[0].mxu0
        %v736 = vadd.f32 %v693, %v735
        %v737 = vpop.f32.mrb[0].mxu0
        %v738 = vpop.f32.mrb[0].mxu0
        %v739 = vpop.f32.mrb[0].mxu0
        %740 = vdwg.mxu0
        %v741 = vld [vmem:[%s5] sm:$0x1]
        %v743 = vlaneseq
        %v744 = vshrl.u32 %v743, 7
        %v745 = vsub.s32 0, %v744
        %v746 = vrot.slane %v741, %v745
        %v748 = vadd.f32 %v736, %v746
        %v749 = vld [vmem:[%s6] sm:$0xff]
        %v750 = vld [vmem:[%s6 + $0x8] sm:$0xff]
        %v751 = vld [vmem:[%s6 + $0x10] sm:$0xff]
        %v752 = vld [vmem:[%s6 + $0x18] sm:$0xff]
        %v753 = vpack.c.bf16 %v748, %v748
        %v754 = vpack.c.bf16 %v750, %v749
        %v755 = vpack.c.bf16 %v752, %v751
        %v756 = vld [vmem:[%s7] sm:$0x1]
        %v758 = vlaneseq
        %v759 = vshrl.u32 %v758, 7
        %v760 = vsub.s32 0, %v759
        %v761 = vrot.slane %v756, %v760
        %vm763 = vcmask 261120
        %v765 = vsel %vm763, %v753, 0
        %767 = vmatprep.subr.bf16.mxu0 0
        %768 = vmatpush1.bf16.msra.mxu0 %v754
        %769 = vmatprep.subr.bf16.mxu0 0
        %770 = vmatpush1.bf16.msra.mxu0 %v755
        %771 = vmatprep.subr.bf16.mxu0 0
        %772 = vmatpush1.bf16.msra.mxu0 0
        %773 = vmatprep.subr.bf16.mxu0 0
        %774 = vmatpush1.bf16.msra.mxu0 0
        %775 = vmatprep.subr.bf16.mxu0 0
        %776 = vmatpush1.bf16.msra.mxu0 0
        %777 = vmatprep.subr.bf16.mxu0 0
        %778 = vmatpush1.bf16.msra.mxu0 0
        %779 = vmatprep.subr.bf16.mxu0 0
        %780 = vmatpush1.bf16.msra.mxu0 0
        %781 = vmatprep.subr.bf16.mxu0 0
        %782 = vmatpush1.bf16.msra.mxu0 0
        %783 = vmatprep.subr.bf16.mxu0 0
        %784 = vmatpush1.bf16.msra.mxu0 0
        %785 = vmatprep.subr.bf16.mxu0 0
        %786 = vmatpush1.bf16.msra.mxu0 0
        %787 = vmatprep.subr.bf16.mxu0 0
        %788 = vmatpush1.bf16.msra.mxu0 0
        %789 = vmatprep.subr.bf16.mxu0 0
        %790 = vmatpush1.bf16.msra.mxu0 0
        %791 = vmatprep.subr.bf16.mxu0 0
        %792 = vmatpush1.bf16.msra.mxu0 0
        %793 = vmatprep.subr.bf16.mxu0 0
        %794 = vmatpush1.bf16.msra.mxu0 0
        %795 = vmatprep.subr.bf16.mxu0 0
        %796 = vmatpush1.bf16.msra.mxu0 0
        %797 = vmatprep.subr.bf16.mxu0 0
        %798 = vmatpush1.bf16.msra.mxu0 0
        %799 = vmatprep.mubr.bf16.mxu0 0
        %800 = vmatmul.mubr.bf16.gmra.mrb[0].mxu0 %v765
        %v801 = vpop.f32.mrb[0].mxu0
        %v802 = vadd.f32 %v761, %v801
        %v803 = vpop.f32.mrb[0].mxu0
        %v804 = vpop.f32.mrb[0].mxu0
        %v805 = vpop.f32.mrb[0].mxu0
        %806 = vdwg.mxu0
        %807 = vst.msk [vmem:[%s601] sm:$0xff] %vm763, %v802
        %v808 = vsel %vm763, %v802, 0.0
        %v809 = vrot.slane %v808, 4
        %v810 = vadd.f32 %v808, %v809
        %v811 = vrot.slane %v810, 2
        %v812 = vadd.f32 %v810, %v811
        %v813 = vrot.slane %v812, 1
        %v814 = vadd.f32 %v812, %v813
        %v815 = vrcp.pop 8.0
        %v816 = vmul.f32 %v814, %v815
        %v817 = vld [vmem:[%s8] sm:$0xff]
        %v818 = vld [vmem:[%s8 + $0x8] sm:$0xff]
        %v819 = vld [vmem:[%s8 + $0x10] sm:$0xff]
        %v820 = vld [vmem:[%s8 + $0x18] sm:$0xff]
        %v821 = vpack.c.bf16 %v816, %v816
        %v822 = vpack.c.bf16 %v818, %v817
        %v823 = vpack.c.bf16 %v820, %v819
        %v825 = vsel %vm763, %v821, 0
        %827 = vmatprep.subr.bf16.mxu0 0
        %828 = vmatpush1.bf16.msra.mxu0 %v822
        %829 = vmatprep.subr.bf16.mxu0 0
        %830 = vmatpush1.bf16.msra.mxu0 %v823
        %831 = vmatprep.subr.bf16.mxu0 0
        %832 = vmatpush1.bf16.msra.mxu0 0
        %833 = vmatprep.subr.bf16.mxu0 0
        %834 = vmatpush1.bf16.msra.mxu0 0
        %835 = vmatprep.subr.bf16.mxu0 0
        %836 = vmatpush1.bf16.msra.mxu0 0
        %837 = vmatprep.subr.bf16.mxu0 0
        %838 = vmatpush1.bf16.msra.mxu0 0
        %839 = vmatprep.subr.bf16.mxu0 0
        %840 = vmatpush1.bf16.msra.mxu0 0
        %841 = vmatprep.subr.bf16.mxu0 0
        %842 = vmatpush1.bf16.msra.mxu0 0
        %843 = vmatprep.subr.bf16.mxu0 0
        %844 = vmatpush1.bf16.msra.mxu0 0
        %845 = vmatprep.subr.bf16.mxu0 0
        %846 = vmatpush1.bf16.msra.mxu0 0
        %847 = vmatprep.subr.bf16.mxu0 0
        %848 = vmatpush1.bf16.msra.mxu0 0
        %849 = vmatprep.subr.bf16.mxu0 0
        %850 = vmatpush1.bf16.msra.mxu0 0
        %851 = vmatprep.subr.bf16.mxu0 0
        %852 = vmatpush1.bf16.msra.mxu0 0
        %853 = vmatprep.subr.bf16.mxu0 0
        %854 = vmatpush1.bf16.msra.mxu0 0
        %855 = vmatprep.subr.bf16.mxu0 0
        %856 = vmatpush1.bf16.msra.mxu0 0
        %857 = vmatprep.subr.bf16.mxu0 0
        %858 = vmatpush1.bf16.msra.mxu0 0
        %859 = vmatprep.mubr.bf16.mxu0 0
        %860 = vmatmul.mubr.bf16.gmra.mrb[0].mxu0 %v825
        %v861 = vpop.f32.mrb[0].mxu0
        %v862 = vadd.f32 0.0, %v861
        %v863 = vpop.f32.mrb[0].mxu0
        %v864 = vpop.f32.mrb[0].mxu0
        %v865 = vpop.f32.mrb[0].mxu0
        %866 = vdwg.mxu0
        %vm867 = vcmask 122880
        %868 = vst.msk [vmem:[%s607] sm:$0x1] %vm867, %v862
        %v869 = vld [vmem:[%s9] sm:$0xff]
        %v870 = vld [vmem:[%s9 + $0x8] sm:$0xff]
        %v871 = vld [vmem:[%s9 + $0x10] sm:$0xff]
        %v872 = vld [vmem:[%s9 + $0x18] sm:$0xff]
        %v873 = vpack.c.bf16 %v802, %v802
        %v874 = vpack.c.bf16 %v870, %v869
        %v875 = vpack.c.bf16 %v872, %v871
        %v876 = vld [vmem:[%s10] sm:$0xff]
        %v877 = vld [vmem:[%s10 + $0x8] sm:$0xff]
        %v878 = vpack.c.bf16 %v862, %v862
        %v879 = vpack.c.bf16 %v877, %v876
        %v881 = vsel %vm654, %v878, 0
        %883 = vmatprep.subr.bf16.mxu0 0
        %884 = vmatpush1.bf16.msra.mxu0 %v879
        %885 = vmatprep.subr.bf16.mxu0 0
        %886 = vmatpush1.bf16.msra.mxu0 0
        %887 = vmatprep.subr.bf16.mxu0 0
        %888 = vmatpush1.bf16.msra.mxu0 0
        %889 = vmatprep.subr.bf16.mxu0 0
        %890 = vmatpush1.bf16.msra.mxu0 0
        %891 = vmatprep.subr.bf16.mxu0 0
        %892 = vmatpush1.bf16.msra.mxu0 0
        %893 = vmatprep.subr.bf16.mxu0 0
        %894 = vmatpush1.bf16.msra.mxu0 0
        %895 = vmatprep.subr.bf16.mxu0 0
        %896 = vmatpush1.bf16.msra.mxu0 0
        %897 = vmatprep.subr.bf16.mxu0 0
        %898 = vmatpush1.bf16.msra.mxu0 0
        %899 = vmatprep.subr.bf16.mxu0 0
        %900 = vmatpush1.bf16.msra.mxu0 0
        %901 = vmatprep.subr.bf16.mxu0 0
        %902 = vmatpush1.bf16.msra.mxu0 0
        %903 = vmatprep.subr.bf16.mxu0 0
        %904 = vmatpush1.bf16.msra.mxu0 0
        %905 = vmatprep.subr.bf16.mxu0 0
        %906 = vmatpush1.bf16.msra.mxu0 0
        %907 = vmatprep.subr.bf16.mxu0 0
        %908 = vmatpush1.bf16.msra.mxu0 0
        %909 = vmatprep.subr.bf16.mxu0 0
        %910 = vmatpush1.bf16.msra.mxu0 0
        %911 = vmatprep.subr.bf16.mxu0 0
        %912 = vmatpush1.bf16.msra.mxu0 0
        %913 = vmatprep.subr.bf16.mxu0 0
        %914 = vmatpush1.bf16.msra.mxu0 0
        %915 = vmatprep.mubr.bf16.mxu0 0
        %916 = vmatmul.mubr.bf16.gmra.mrb[0].mxu0 %v881
        %v917 = vpop.f32.mrb[0].mxu0
        %v918 = vadd.f32 0.0, %v917
        %v919 = vpop.f32.mrb[0].mxu0
        %v920 = vpop.f32.mrb[0].mxu0
        %v921 = vpop.f32.mrb[0].mxu0
        %922 = vdwg.mxu0
        %v923 = vlaneseq
        %v924 = vshrl.u32 %v923, 7
        %v925 = vsub.s32 0, %v924
        %v926 = vrot.slane %v918, %v925
        %v928 = vsel %vm763, %v873, 0
        %930 = vmatprep.subr.bf16.mxu0 0
        %931 = vmatpush1.bf16.msra.mxu0 %v874
        %932 = vmatprep.subr.bf16.mxu0 0
        %933 = vmatpush1.bf16.msra.mxu0 %v875
        %934 = vmatprep.subr.bf16.mxu0 0
        %935 = vmatpush1.bf16.msra.mxu0 0
        %936 = vmatprep.subr.bf16.mxu0 0
        %937 = vmatpush1.bf16.msra.mxu0 0
        %938 = vmatprep.subr.bf16.mxu0 0
        %939 = vmatpush1.bf16.msra.mxu0 0
        %940 = vmatprep.subr.bf16.mxu0 0
        %941 = vmatpush1.bf16.msra.mxu0 0
        %942 = vmatprep.subr.bf16.mxu0 0
        %943 = vmatpush1.bf16.msra.mxu0 0
        %944 = vmatprep.subr.bf16.mxu0 0
        %945 = vmatpush1.bf16.msra.mxu0 0
        %946 = vmatprep.subr.bf16.mxu0 0
        %947 = vmatpush1.bf16.msra.mxu0 0
        %948 = vmatprep.subr.bf16.mxu0 0
        %949 = vmatpush1.bf16.msra.mxu0 0
        %950 = vmatprep.subr.bf16.mxu0 0
        %951 = vmatpush1.bf16.msra.mxu0 0
        %952 = vmatprep.subr.bf16.mxu0 0
        %953 = vmatpush1.bf16.msra.mxu0 0
        %954 = vmatprep.subr.bf16.mxu0 0
        %955 = vmatpush1.bf16.msra.mxu0 0
        %956 = vmatprep.subr.bf16.mxu0 0
        %957 = vmatpush1.bf16.msra.mxu0 0
        %958 = vmatprep.subr.bf16.mxu0 0
        %959 = vmatpush1.bf16.msra.mxu0 0
        %960 = vmatprep.subr.bf16.mxu0 0
        %961 = vmatpush1.bf16.msra.mxu0 0
        %962 = vmatprep.mubr.bf16.mxu0 0
        %963 = vmatmul.mubr.bf16.gmra.mrb[0].mxu0 %v928
        %v964 = vpop.f32.mrb[0].mxu0
        %v965 = vadd.f32 %v926, %v964
        %v966 = vpop.f32.mrb[0].mxu0
        %v967 = vpop.f32.mrb[0].mxu0
        %v968 = vpop.f32.mrb[0].mxu0
        %969 = vdwg.mxu0
        %970 = vxpose.xlu0.b32.start [1/16] %v965, 128
        %971 = vxpose.xlu0.b32.cont [2/16] 0.0, 128
        %972 = vxpose.xlu0.b32.cont [3/16] 0.0, 128
        %973 = vxpose.xlu0.b32.cont [4/16] 0.0, 128
        %974 = vxpose.xlu0.b32.cont [5/16] 0.0, 128
        %975 = vxpose.xlu0.b32.cont [6/16] 0.0, 128
        %976 = vxpose.xlu0.b32.cont [7/16] 0.0, 128
        %977 = vxpose.xlu0.b32.cont [8/16] 0.0, 128
        %978 = vxpose.xlu0.b32.cont [9/16] 0.0, 128
        %979 = vxpose.xlu0.b32.cont [10/16] 0.0, 128
        %980 = vxpose.xlu0.b32.cont [11/16] 0.0, 128
        %981 = vxpose.xlu0.b32.cont [12/16] 0.0, 128
        %982 = vxpose.xlu0.b32.cont [13/16] 0.0, 128
        %983 = vxpose.xlu0.b32.cont [14/16] 0.0, 128
        %984 = vxpose.xlu0.b32.cont [15/16] 0.0, 128
        %985 = vxpose.xlu0.b32.end [16/16] 0.0, 128
        %v986 = vpop.trf.xlu0
        %v987 = vpop.trf.xlu0
        %v988 = vpop.trf.xlu0
        %v989 = vpop.trf.xlu0
        %v990 = vpop.trf.xlu0
        %v991 = vpop.trf.xlu0
        %v992 = vpop.trf.xlu0
        %v993 = vpop.trf.xlu0
        %v994 = vpop.trf.xlu0
        %v995 = vpop.trf.xlu0
        %v996 = vpop.trf.xlu0
        %v997 = vpop.trf.xlu0
        %v998 = vpop.trf.xlu0
        %v999 = vpop.trf.xlu0
        %v1000 = vpop.trf.xlu0
        %v1001 = vpop.trf.xlu0
        %v1002 = vmul.f32 %v965, %v965
        %v1003 = vsel %vm763, %v1002, 0.0
        %1004 = vadd.xlane.f32.xlu0 %v1003
        %v1005 = vpop.xlane.xlu0 %1004
        %v1006 = vrot.slane %v1005, 4
        %v1007 = vadd.f32 %v1005, %v1006
        %v1008 = vrot.slane %v1007, 2
        %v1009 = vadd.f32 %v1007, %v1008
        %v1010 = vrot.slane %v1009, 1
        %v1011 = vadd.f32 %v1009, %v1010
        %s1012 = vtos %v1011
        %v1013 = vld [vmem:[%s639] sm:$0xff]
        %v1014 = vld [vmem:[%s639 + $0x8] sm:$0xff]
        %v1015 = vld [vmem:[%s639 + $0x10] sm:$0xff]
        %v1016 = vld [vmem:[%s639 + $0x18] sm:$0xff]
        %v1017 = vmul.f32 %v986, %v1013
        %v1018 = vmul.f32 %v987, %v1014
        %v1019 = vmul.f32 %v988, %v1015
        %v1020 = vmul.f32 %v989, %v1016
        %vm1021 = vcmask 64512
        %v1022 = vsel %vm1021, %v1017, 0.0
        %v1023 = vsel %vm1021, %v1018, 0.0
        %v1024 = vadd.f32 %v1022, %v1023
        %v1025 = vsel %vm1021, %v1019, 0.0
        %v1026 = vadd.f32 %v1024, %v1025
        %v1027 = vsel %vm1021, %v1020, 0.0
        %v1028 = vadd.f32 %v1026, %v1027
        %1029 = vadd.xlane.f32.xlu0 %v1028
        %v1030 = vpop.xlane.xlu0 %1029
        %v1031 = vrot.slane %v1030, 4
        %v1032 = vadd.f32 %v1030, %v1031
        %v1033 = vrot.slane %v1032, 2
        %v1034 = vadd.f32 %v1032, %v1033
        %v1035 = vrot.slane %v1034, 1
        %v1036 = vadd.f32 %v1034, %v1035
        %s1037 = vtos %v1036
        %v1038 = vmul.f32 %v1013, %v1013
        %v1039 = vmul.f32 %v1014, %v1014
        %v1040 = vmul.f32 %v1015, %v1015
        %v1041 = vmul.f32 %v1016, %v1016
        %v1042 = vsel %vm1021, %v1038, 0.0
        %v1043 = vsel %vm1021, %v1039, 0.0
        %v1044 = vadd.f32 %v1042, %v1043
        %v1045 = vsel %vm1021, %v1040, 0.0
        %v1046 = vadd.f32 %v1044, %v1045
        %v1047 = vsel %vm1021, %v1041, 0.0
        %v1048 = vadd.f32 %v1046, %v1047
        %1049 = vadd.xlane.f32.xlu0 %v1048
        %v1050 = vpop.xlane.xlu0 %1049
        %v1051 = vrot.slane %v1050, 4
        %v1052 = vadd.f32 %v1050, %v1051
        %v1053 = vrot.slane %v1052, 2
        %v1054 = vadd.f32 %v1052, %v1053
        %v1055 = vrot.slane %v1054, 1
        %v1056 = vadd.f32 %v1054, %v1055
        %s1057 = vtos %v1056
        %s1058 = sadd.f32 %s1012, %s1057
        %s1059 = smul.f32 %s1037, 2.0
        %s1060 = ssub.f32 %s1058, %s1059
        %s1061 = smul.f32 %s1060, 0.00390625
        %s1062 = scalar_lea.vmem %s639, 32
        %v1063 = vld [vmem:[%s1062] sm:$0xff]
        %v1064 = vld [vmem:[%s1062 + $0x8] sm:$0xff]
        %v1065 = vld [vmem:[%s1062 + $0x10] sm:$0xff]
        %v1066 = vld [vmem:[%s1062 + $0x18] sm:$0xff]
        %v1067 = vmul.f32 %v986, %v1063
        %v1068 = vmul.f32 %v987, %v1064
        %v1069 = vmul.f32 %v988, %v1065
        %v1070 = vmul.f32 %v989, %v1066
        %v1071 = vsel %vm1021, %v1067, 0.0
        %v1072 = vsel %vm1021, %v1068, 0.0
        %v1073 = vadd.f32 %v1071, %v1072
        %v1074 = vsel %vm1021, %v1069, 0.0
        %v1075 = vadd.f32 %v1073, %v1074
        %v1076 = vsel %vm1021, %v1070, 0.0
        %v1077 = vadd.f32 %v1075, %v1076
        %1078 = vadd.xlane.f32.xlu0 %v1077
        %v1079 = vpop.xlane.xlu0 %1078
        %v1080 = vrot.slane %v1079, 4
        %v1081 = vadd.f32 %v1079, %v1080
        %v1082 = vrot.slane %v1081, 2
        %v1083 = vadd.f32 %v1081, %v1082
        %v1084 = vrot.slane %v1083, 1
        %v1085 = vadd.f32 %v1083, %v1084
        %s1086 = vtos %v1085
        %v1087 = vmul.f32 %v1063, %v1063
        %v1088 = vmul.f32 %v1064, %v1064
        %v1089 = vmul.f32 %v1065, %v1065
        %v1090 = vmul.f32 %v1066, %v1066
        %v1091 = vsel %vm1021, %v1087, 0.0
        %v1092 = vsel %vm1021, %v1088, 0.0
        %v1093 = vadd.f32 %v1091, %v1092
        %v1094 = vsel %vm1021, %v1089, 0.0
        %v1095 = vadd.f32 %v1093, %v1094
        %v1096 = vsel %vm1021, %v1090, 0.0
        %v1097 = vadd.f32 %v1095, %v1096
        %1098 = vadd.xlane.f32.xlu0 %v1097
        %v1099 = vpop.xlane.xlu0 %1098
        %v1100 = vrot.slane %v1099, 4
        %v1101 = vadd.f32 %v1099, %v1100
        %v1102 = vrot.slane %v1101, 2
        %v1103 = vadd.f32 %v1101, %v1102
        %v1104 = vrot.slane %v1103, 1
        %v1105 = vadd.f32 %v1103, %v1104
        %s1106 = vtos %v1105
        %s1107 = sadd.f32 %s1012, %s1106
        %s1108 = smul.f32 %s1086, 2.0
        %s1109 = ssub.f32 %s1107, %s1108
        %s1110 = smul.f32 %s1109, 0.00390625
        %p1111 = scmp.lt.f32.partialorder %s1110, %s1061
        %s1112 = scalar_select %p1111, 1, 0
        %s1113 = scvt.s32.f32 %s1112
        %s1114 = smin.f32 %s1110, %s1061
        %v1115 = vstv %s1113
        %v1116 = vmul.f32 %v1115, %v1063
        %v1117 = vmul.f32 %v1115, %v1064
        %v1118 = vmul.f32 %v1115, %v1065
        %v1119 = vmul.f32 %v1115, %v1066
        %s1120 = ssub.f32 1.0, %s1113
        %v1121 = vstv %s1120
        %v1122 = vmul.f32 %v1121, %v1013
        %v1123 = vmul.f32 %v1121, %v1014
        %v1124 = vmul.f32 %v1121, %v1015
        %v1125 = vmul.f32 %v1121, %v1016
        %v1126 = vadd.f32 %v1116, %v1122
        %v1127 = vadd.f32 %v1117, %v1123
        %v1128 = vadd.f32 %v1118, %v1124
        %v1129 = vadd.f32 %v1119, %v1125
        %s1130 = scalar_lea.vmem %s639, 64
        %v1131 = vld [vmem:[%s1130] sm:$0xff]
        %v1132 = vld [vmem:[%s1130 + $0x8] sm:$0xff]
        %v1133 = vld [vmem:[%s1130 + $0x10] sm:$0xff]
        %v1134 = vld [vmem:[%s1130 + $0x18] sm:$0xff]
        %v1135 = vmul.f32 %v986, %v1131
        %v1136 = vmul.f32 %v987, %v1132
        %v1137 = vmul.f32 %v988, %v1133
        %v1138 = vmul.f32 %v989, %v1134
        %v1139 = vsel %vm1021, %v1135, 0.0
        %v1140 = vsel %vm1021, %v1136, 0.0
        %v1141 = vadd.f32 %v1139, %v1140
        %v1142 = vsel %vm1021, %v1137, 0.0
        %v1143 = vadd.f32 %v1141, %v1142
        %v1144 = vsel %vm1021, %v1138, 0.0
        %v1145 = vadd.f32 %v1143, %v1144
        %1146 = vadd.xlane.f32.xlu0 %v1145
        %v1147 = vpop.xlane.xlu0 %1146
        %v1148 = vrot.slane %v1147, 4
        %v1149 = vadd.f32 %v1147, %v1148
        %v1150 = vrot.slane %v1149, 2
        %v1151 = vadd.f32 %v1149, %v1150
        %v1152 = vrot.slane %v1151, 1
        %v1153 = vadd.f32 %v1151, %v1152
        %s1154 = vtos %v1153
        %v1155 = vmul.f32 %v1131, %v1131
        %v1156 = vmul.f32 %v1132, %v1132
        %v1157 = vmul.f32 %v1133, %v1133
        %v1158 = vmul.f32 %v1134, %v1134
        %v1159 = vsel %vm1021, %v1155, 0.0
        %v1160 = vsel %vm1021, %v1156, 0.0
        %v1161 = vadd.f32 %v1159, %v1160
        %v1162 = vsel %vm1021, %v1157, 0.0
        %v1163 = vadd.f32 %v1161, %v1162
        %v1164 = vsel %vm1021, %v1158, 0.0
        %v1165 = vadd.f32 %v1163, %v1164
        %1166 = vadd.xlane.f32.xlu0 %v1165
        %v1167 = vpop.xlane.xlu0 %1166
        %v1168 = vrot.slane %v1167, 4
        %v1169 = vadd.f32 %v1167, %v1168
        %v1170 = vrot.slane %v1169, 2
        %v1171 = vadd.f32 %v1169, %v1170
        %v1172 = vrot.slane %v1171, 1
        %v1173 = vadd.f32 %v1171, %v1172
        %s1174 = vtos %v1173
        %s1175 = sadd.f32 %s1012, %s1174
        %s1176 = smul.f32 %s1154, 2.0
        %s1177 = ssub.f32 %s1175, %s1176
        %s1178 = smul.f32 %s1177, 0.00390625
        %p1179 = scmp.lt.f32.partialorder %s1178, %s1114
        %s1180 = scalar_select %p1179, 1, 0
        %s1181 = scvt.s32.f32 %s1180
        %s1182 = smin.f32 %s1178, %s1114
        %v1183 = vstv %s1181
        %v1184 = vmul.f32 %v1183, %v1131
        %v1185 = vmul.f32 %v1183, %v1132
        %v1186 = vmul.f32 %v1183, %v1133
        %v1187 = vmul.f32 %v1183, %v1134
        %s1188 = ssub.f32 1.0, %s1181
        %v1189 = vstv %s1188
        %v1190 = vmul.f32 %v1189, %v1126
        %v1191 = vmul.f32 %v1189, %v1127
        %v1192 = vmul.f32 %v1189, %v1128
        %v1193 = vmul.f32 %v1189, %v1129
        %v1194 = vadd.f32 %v1184, %v1190
        %v1195 = vadd.f32 %v1185, %v1191
        %v1196 = vadd.f32 %v1186, %v1192
        %v1197 = vadd.f32 %v1187, %v1193
        %s1198 = scalar_lea.vmem %s639, 96
        %v1199 = vld [vmem:[%s1198] sm:$0xff]
        %v1200 = vld [vmem:[%s1198 + $0x8] sm:$0xff]
        %v1201 = vld [vmem:[%s1198 + $0x10] sm:$0xff]
        %v1202 = vld [vmem:[%s1198 + $0x18] sm:$0xff]
        %v1203 = vmul.f32 %v986, %v1199
        %v1204 = vmul.f32 %v987, %v1200
        %v1205 = vmul.f32 %v988, %v1201
        %v1206 = vmul.f32 %v989, %v1202
        %v1207 = vsel %vm1021, %v1203, 0.0
        %v1208 = vsel %vm1021, %v1204, 0.0
        %v1209 = vadd.f32 %v1207, %v1208
        %v1210 = vsel %vm1021, %v1205, 0.0
        %v1211 = vadd.f32 %v1209, %v1210
        %v1212 = vsel %vm1021, %v1206, 0.0
        %v1213 = vadd.f32 %v1211, %v1212
        %1214 = vadd.xlane.f32.xlu0 %v1213
        %v1215 = vpop.xlane.xlu0 %1214
        %v1216 = vrot.slane %v1215, 4
        %v1217 = vadd.f32 %v1215, %v1216
        %v1218 = vrot.slane %v1217, 2
        %v1219 = vadd.f32 %v1217, %v1218
        %v1220 = vrot.slane %v1219, 1
        %v1221 = vadd.f32 %v1219, %v1220
        %s1222 = vtos %v1221
        %v1223 = vmul.f32 %v1199, %v1199
        %v1224 = vmul.f32 %v1200, %v1200
        %v1225 = vmul.f32 %v1201, %v1201
        %v1226 = vmul.f32 %v1202, %v1202
        %v1227 = vsel %vm1021, %v1223, 0.0
        %v1228 = vsel %vm1021, %v1224, 0.0
        %v1229 = vadd.f32 %v1227, %v1228
        %v1230 = vsel %vm1021, %v1225, 0.0
        %v1231 = vadd.f32 %v1229, %v1230
        %v1232 = vsel %vm1021, %v1226, 0.0
        %v1233 = vadd.f32 %v1231, %v1232
        %1234 = vadd.xlane.f32.xlu0 %v1233
        %v1235 = vpop.xlane.xlu0 %1234
        %v1236 = vrot.slane %v1235, 4
        %v1237 = vadd.f32 %v1235, %v1236
        %v1238 = vrot.slane %v1237, 2
        %v1239 = vadd.f32 %v1237, %v1238
        %v1240 = vrot.slane %v1239, 1
        %v1241 = vadd.f32 %v1239, %v1240
        %s1242 = vtos %v1241
        %s1243 = sadd.f32 %s1012, %s1242
        %s1244 = smul.f32 %s1222, 2.0
        %s1245 = ssub.f32 %s1243, %s1244
        %s1246 = smul.f32 %s1245, 0.00390625
        %p1247 = scmp.lt.f32.partialorder %s1246, %s1182
        %s1248 = scalar_select %p1247, 1, 0
        %s1249 = scvt.s32.f32 %s1248
        %v1250 = vstv %s1249
        %v1251 = vmul.f32 %v1250, %v1199
        %v1252 = vmul.f32 %v1250, %v1200
        %v1253 = vmul.f32 %v1250, %v1201
        %v1254 = vmul.f32 %v1250, %v1202
        %s1255 = ssub.f32 1.0, %s1249
        %v1256 = vstv %s1255
        %v1257 = vmul.f32 %v1256, %v1194
        %v1258 = vmul.f32 %v1256, %v1195
        %v1259 = vmul.f32 %v1256, %v1196
        %v1260 = vmul.f32 %v1256, %v1197
        %v1261 = vadd.f32 %v1251, %v1257
        %v1262 = vadd.f32 %v1252, %v1258
        %v1263 = vadd.f32 %v1253, %v1259
        %v1264 = vadd.f32 %v1254, %v1260
        %1265 = vxpose.xlu0.b32.start [1/16] %v1261, 128
        %1266 = vxpose.xlu0.b32.cont [2/16] %v1262, 128
        %1267 = vxpose.xlu0.b32.cont [3/16] %v1263, 128
        %1268 = vxpose.xlu0.b32.cont [4/16] %v1264, 128
        %1269 = vxpose.xlu0.b32.cont [5/16] 0.0, 128
        %1270 = vxpose.xlu0.b32.cont [6/16] 0.0, 128
        %1271 = vxpose.xlu0.b32.cont [7/16] 0.0, 128
        %1272 = vxpose.xlu0.b32.cont [8/16] 0.0, 128
        %1273 = vxpose.xlu0.b32.cont [9/16] 0.0, 128
        %1274 = vxpose.xlu0.b32.cont [10/16] 0.0, 128
        %1275 = vxpose.xlu0.b32.cont [11/16] 0.0, 128
        %1276 = vxpose.xlu0.b32.cont [12/16] 0.0, 128
        %1277 = vxpose.xlu0.b32.cont [13/16] 0.0, 128
        %1278 = vxpose.xlu0.b32.cont [14/16] 0.0, 128
        %1279 = vxpose.xlu0.b32.cont [15/16] 0.0, 128
        %1280 = vxpose.xlu0.b32.end [16/16] 0.0, 128
        %v1281 = vpop.trf.xlu0
        %v1282 = vpop.trf.xlu0
        %v1283 = vpop.trf.xlu0
        %v1284 = vpop.trf.xlu0
        %v1285 = vpop.trf.xlu0
        %v1286 = vpop.trf.xlu0
        %v1287 = vpop.trf.xlu0
        %v1288 = vpop.trf.xlu0
        %v1289 = vpop.trf.xlu0
        %v1290 = vpop.trf.xlu0
        %v1291 = vpop.trf.xlu0
        %v1292 = vpop.trf.xlu0
        %v1293 = vpop.trf.xlu0
        %v1294 = vpop.trf.xlu0
        %v1295 = vpop.trf.xlu0
        %v1296 = vpop.trf.xlu0
        %1297 = vst.msk [vmem:[%s621] sm:$0xff] %vm763, %v1281
        %v1298 = vld [vmem:[%s13] sm:$0x1]
        %v1299 = vld [vmem:[%s11] sm:$0xff]
        %v1300 = vld [vmem:[%s11 + $0x8] sm:$0xff]
        %v1301 = vld [vmem:[%s11 + $0x10] sm:$0xff]
        %v1302 = vld [vmem:[%s11 + $0x18] sm:$0xff]
        %v1303 = vpack.c.bf16 %v1281, %v1281
        %v1304 = vpack.c.bf16 %v1300, %v1299
        %v1305 = vpack.c.bf16 %v1302, %v1301
        %v1306 = vld [vmem:[%s12] sm:$0xff]
        %v1307 = vld [vmem:[%s12 + $0x8] sm:$0xff]
        %v1308 = vpack.c.bf16 %v1307, %v1306
        %1309 = vmatprep.subr.bf16.mxu0 0
        %1310 = vmatpush1.bf16.msra.mxu0 %v1308
        %1311 = vmatprep.subr.bf16.mxu0 0
        %1312 = vmatpush1.bf16.msra.mxu0 0
        %1313 = vmatprep.subr.bf16.mxu0 0
        %1314 = vmatpush1.bf16.msra.mxu0 0
        %1315 = vmatprep.subr.bf16.mxu0 0
        %1316 = vmatpush1.bf16.msra.mxu0 0
        %1317 = vmatprep.subr.bf16.mxu0 0
        %1318 = vmatpush1.bf16.msra.mxu0 0
        %1319 = vmatprep.subr.bf16.mxu0 0
        %1320 = vmatpush1.bf16.msra.mxu0 0
        %1321 = vmatprep.subr.bf16.mxu0 0
        %1322 = vmatpush1.bf16.msra.mxu0 0
        %1323 = vmatprep.subr.bf16.mxu0 0
        %1324 = vmatpush1.bf16.msra.mxu0 0
        %1325 = vmatprep.subr.bf16.mxu0 0
        %1326 = vmatpush1.bf16.msra.mxu0 0
        %1327 = vmatprep.subr.bf16.mxu0 0
        %1328 = vmatpush1.bf16.msra.mxu0 0
        %1329 = vmatprep.subr.bf16.mxu0 0
        %1330 = vmatpush1.bf16.msra.mxu0 0
        %1331 = vmatprep.subr.bf16.mxu0 0
        %1332 = vmatpush1.bf16.msra.mxu0 0
        %1333 = vmatprep.subr.bf16.mxu0 0
        %1334 = vmatpush1.bf16.msra.mxu0 0
        %1335 = vmatprep.subr.bf16.mxu0 0
        %1336 = vmatpush1.bf16.msra.mxu0 0
        %1337 = vmatprep.subr.bf16.mxu0 0
        %1338 = vmatpush1.bf16.msra.mxu0 0
        %1339 = vmatprep.subr.bf16.mxu0 0
        %1340 = vmatpush1.bf16.msra.mxu0 0
        %1341 = vmatprep.mubr.bf16.mxu0 0
        %1342 = vmatmul.mubr.bf16.gmra.mrb[0].mxu0 %v881
        %v1343 = vpop.f32.mrb[0].mxu0
        %v1344 = vadd.f32 0.0, %v1343
        %v1345 = vpop.f32.mrb[0].mxu0
        %v1346 = vpop.f32.mrb[0].mxu0
        %v1347 = vpop.f32.mrb[0].mxu0
        %1348 = vdwg.mxu0
        %v1349 = vlaneseq
        %v1350 = vshrl.u32 %v1349, 7
        %v1351 = vsub.s32 0, %v1350
        %v1352 = vrot.slane %v1344, %v1351
        %v1354 = vsel %vm763, %v1303, 0
        %1356 = vmatprep.subr.bf16.mxu0 0
        %1357 = vmatpush1.bf16.msra.mxu0 %v1304
        %1358 = vmatprep.subr.bf16.mxu0 0
        %1359 = vmatpush1.bf16.msra.mxu0 %v1305
        %1360 = vmatprep.subr.bf16.mxu0 0
        %1361 = vmatpush1.bf16.msra.mxu0 0
        %1362 = vmatprep.subr.bf16.mxu0 0
        %1363 = vmatpush1.bf16.msra.mxu0 0
        %1364 = vmatprep.subr.bf16.mxu0 0
        %1365 = vmatpush1.bf16.msra.mxu0 0
        %1366 = vmatprep.subr.bf16.mxu0 0
        %1367 = vmatpush1.bf16.msra.mxu0 0
        %1368 = vmatprep.subr.bf16.mxu0 0
        %1369 = vmatpush1.bf16.msra.mxu0 0
        %1370 = vmatprep.subr.bf16.mxu0 0
        %1371 = vmatpush1.bf16.msra.mxu0 0
        %1372 = vmatprep.subr.bf16.mxu0 0
        %1373 = vmatpush1.bf16.msra.mxu0 0
        %1374 = vmatprep.subr.bf16.mxu0 0
        %1375 = vmatpush1.bf16.msra.mxu0 0
        %1376 = vmatprep.subr.bf16.mxu0 0
        %1377 = vmatpush1.bf16.msra.mxu0 0
        %1378 = vmatprep.subr.bf16.mxu0 0
        %1379 = vmatpush1.bf16.msra.mxu0 0
        %1380 = vmatprep.subr.bf16.mxu0 0
        %1381 = vmatpush1.bf16.msra.mxu0 0
        %1382 = vmatprep.subr.bf16.mxu0 0
        %1383 = vmatpush1.bf16.msra.mxu0 0
        %1384 = vmatprep.subr.bf16.mxu0 0
        %1385 = vmatpush1.bf16.msra.mxu0 0
        %1386 = vmatprep.subr.bf16.mxu0 0
        %1387 = vmatpush1.bf16.msra.mxu0 0
        %1388 = vmatprep.mubr.bf16.mxu0 0
        %1389 = vmatmul.mubr.bf16.gmra.mrb[0].mxu0 %v1354
        %v1390 = vpop.f32.mrb[0].mxu0
        %v1391 = vadd.f32 %v1352, %v1390
        %v1392 = vpop.f32.mrb[0].mxu0
        %v1393 = vpop.f32.mrb[0].mxu0
        %v1394 = vpop.f32.mrb[0].mxu0
        %1395 = vdwg.mxu0
        %v1396 = vmul.f32 %v1298, 1.442695
        %v1397 = vpow.pop %v1396
        %v1399 = vlaneseq
        %v1400 = vshrl.u32 %v1399, 7
        %v1401 = vsub.s32 0, %v1400
        %v1402 = vrot.slane %v1397, %v1401
        %v1404 = vmul.f32 %v1391, %v1402
        %1405 = vst.msk [vmem:[%s614] sm:$0xff] %vm763, %v1404
        %vm1406 = vcmask 253952
        %v1407 = vsel %vm1406, %v1298, 0.0
        %1408 = vadd.xlane.f32.xlu0 %v1407
        %v1409 = vpop.xlane.xlu0 %1408
        %v1410 = vmul.f32 %v1409, 8.0
        %vm1411 = vcmask 0
        %1412 = vst.msk [vmem:[%s642] sm:$0x1] %vm1411, %v1410
        %s1413 = sand.u32 %s356, 1
        %s1414 = scalar_lea.sflag [#allocation3], %s1413
        %s1415 = sand.u32 %s356, 1
        %s1416 = smul.addr %s1415, 8
        %s1417 = scalar_lea.vmem [#allocation2], %s1416
        %s1418 = sand.u32 %s39, 1
        %s1419 = scalar_lea.sflag [#allocation5], %s1418
        %s1420 = sand.u32 %s382, 1
        %s1421 = scalar_lea.vmem [#allocation4], %s1420
        %s1422 = sand.u32 %s39, 1
        %s1423 = scalar_lea.sflag [#allocation5], %s1422
        %s1424 = sand.u32 %s408, 1
        %s1425 = smul.addr %s1424, 8
        %s1426 = scalar_lea.vmem [#allocation6], %s1425
        %s1427 = sand.u32 %s434, 1
        %s1428 = scalar_lea.sflag [#allocation8], %s1427
        %s1429 = sand.u32 %s434, 1
        %s1430 = smul.addr %s1429, 8
        %s1431 = scalar_lea.vmem [#allocation7], %s1430
        %p1432 = scmp.lt.s32.totalorder %s39, 1
        %s1433 = scalar_select %p1432, %s39, 1
        %s1434 = scalar_lea.vmem %s18, %s1433
        // Predicated region
        $region77: #{mhp_fused_forward.1} parent=75 // pred_check
          %p1435 = pneg %p366
        $region78: #{mhp_fused_forward.1} parent=75 // pred_check_branch
          %1437 = sbr.rel (%p1435) target = $region80
        $region79: #{mhp_fused_forward.1} parent=75 // pred_region
          %s1439 = ssub.s32 128, 128
          %1440 = vsyncadd %s1414, %s1439
          %s1441 = smul.addr %s39, 128
          %s1442 = scalar_lea.hbm %s14, %s1441
          %s1444 = sshll.u32 %s1417, 4
          %s1445 = int_to_ptr.vmem [resolvable:$true] %s1444
          %1447 = dma.vmem_to_hbm [thread:$0]  %s1445, 128, %s1442, %s1414
        $region80: #{mhp_fused_forward.1} parent=75 // pred_fallthru
          _
        // Predicated region
        $region81: #{mhp_fused_forward.1} parent=75 // pred_check
          %p1448 = pneg %p392
        $region82: #{mhp_fused_forward.1} parent=75 // pred_check_branch
          %1450 = sbr.rel (%p1448) target = $region84
        $region83: #{mhp_fused_forward.1} parent=75 // pred_region
          %s1452 = ssub.s32 16, 16
          %1453 = vsyncadd %s1419, %s1452
          %s1454 = smul.addr %s39, 16
          %s1455 = scalar_lea.hbm %s15, %s1454
          %s1457 = sshll.u32 %s1421, 4
          %s1458 = int_to_ptr.vmem [resolvable:$true] %s1457
          %1460 = dma.vmem_to_hbm [thread:$0]  %s1458, 16, %s1455, %s1419
        $region84: #{mhp_fused_forward.1} parent=75 // pred_fallthru
          _
        // Predicated region
        $region85: #{mhp_fused_forward.1} parent=75 // pred_check
          %p1461 = pneg %p418
        $region86: #{mhp_fused_forward.1} parent=75 // pred_check_branch
          %1463 = sbr.rel (%p1461) target = $region88
        $region87: #{mhp_fused_forward.1} parent=75 // pred_region
          %s1465 = ssub.s32 128, 128
          %1466 = vsyncadd %s1423, %s1465
          %s1467 = smul.addr %s39, 128
          %s1468 = scalar_lea.hbm %s16, %s1467
          %s1470 = sshll.u32 %s1426, 4
          %s1471 = int_to_ptr.vmem [resolvable:$true] %s1470
          %1473 = dma.vmem_to_hbm [thread:$0]  %s1471, 128, %s1468, %s1423
        $region88: #{mhp_fused_forward.1} parent=75 // pred_fallthru
          _
        // Predicated region
        $region89: #{mhp_fused_forward.1} parent=75 // pred_check
          %p1474 = pneg %p444
        $region90: #{mhp_fused_forward.1} parent=75 // pred_check_branch
          %1476 = sbr.rel (%p1474) target = $region92
        $region91: #{mhp_fused_forward.1} parent=75 // pred_region
          %s1478 = ssub.s32 128, 128
          %1479 = vsyncadd %s1428, %s1478
          %s1480 = smul.addr %s39, 128
          %s1481 = scalar_lea.hbm %s17, %s1480
          %s1483 = sshll.u32 %s1431, 4
          %s1484 = int_to_ptr.vmem [resolvable:$true] %s1483
          %1486 = dma.vmem_to_hbm [thread:$0]  %s1484, 128, %s1481, %s1428
        $region92: #{mhp_fused_forward.1} parent=75 // pred_fallthru
          _
        // Predicated region
        $region93: #{mhp_fused_forward.1} parent=75 // pred_check
          %p1487 = pneg %p470
        $region94: #{mhp_fused_forward.1} parent=75 // pred_check_branch
          %1489 = sbr.rel (%p1487) target = $region96
        $region95: #{mhp_fused_forward.1} parent=75 // pred_region
          _
        $region96: #{mhp_fused_forward.1} parent=75 // pred_fallthru
          _
      $region76: #{mhp_fused_forward.1} parent=5 // pred_fallthru
        _
      %p1490 = scmp.le.s32.totalorder 2, %s34
      // Predicated region
      $region97: #{mhp_fused_forward.1} parent=5 // pred_check
        %p1491 = pneg %p1490
      $region98: #{mhp_fused_forward.1} parent=5 // pred_check_branch
        %1493 = sbr.rel (%p1491) target = $region100
      $region99: #{mhp_fused_forward.1} parent=5 // pred_region
        %s1494 = ssub.s32 %s34, 2
        // Predicated region
        $region101: #{mhp_fused_forward.1} parent=99 // pred_check
          %p1495 = pneg %p372
        $region102: #{mhp_fused_forward.1} parent=99 // pred_check_branch
          %1497 = sbr.rel (%p1495) target = $region104
        $region103: #{mhp_fused_forward.1} parent=99 // pred_region
          %s1498 = sand.u32 %s357, 1
          %s1499 = scalar_lea.sflag [#allocation3], %s1498
          %s1500 = sand.u32 %s357, 1
          %s1501 = smul.addr %s1500, 8
          %s1502 = scalar_lea.vmem [#allocation2], %s1501
          %1503 = dma.done %s1499, 128
        $region104: #{mhp_fused_forward.1} parent=99 // pred_fallthru
          _
        // Predicated region
        $region105: #{mhp_fused_forward.1} parent=99 // pred_check
          %p1504 = pneg %p398
        $region106: #{mhp_fused_forward.1} parent=99 // pred_check_branch
          %1506 = sbr.rel (%p1504) target = $region108
        $region107: #{mhp_fused_forward.1} parent=99 // pred_region
          %s1507 = sand.u32 %s40, 1
          %s1508 = scalar_lea.sflag [#allocation5], %s1507
          %s1509 = sand.u32 %s383, 1
          %s1510 = scalar_lea.vmem [#allocation4], %s1509
          %1511 = dma.done %s1508, 16
        $region108: #{mhp_fused_forward.1} parent=99 // pred_fallthru
          _
        // Predicated region
        $region109: #{mhp_fused_forward.1} parent=99 // pred_check
          %p1512 = pneg %p424
        $region110: #{mhp_fused_forward.1} parent=99 // pred_check_branch
          %1514 = sbr.rel (%p1512) target = $region112
        $region111: #{mhp_fused_forward.1} parent=99 // pred_region
          %s1515 = sand.u32 %s40, 1
          %s1516 = scalar_lea.sflag [#allocation5], %s1515
          %s1517 = sand.u32 %s409, 1
          %s1518 = smul.addr %s1517, 8
          %s1519 = scalar_lea.vmem [#allocation6], %s1518
          %1520 = dma.done %s1516, 128
        $region112: #{mhp_fused_forward.1} parent=99 // pred_fallthru
          _
        // Predicated region
        $region113: #{mhp_fused_forward.1} parent=99 // pred_check
          %p1521 = pneg %p450
        $region114: #{mhp_fused_forward.1} parent=99 // pred_check_branch
          %1523 = sbr.rel (%p1521) target = $region116
        $region115: #{mhp_fused_forward.1} parent=99 // pred_region
          %s1524 = sand.u32 %s435, 1
          %s1525 = scalar_lea.sflag [#allocation8], %s1524
          %s1526 = sand.u32 %s435, 1
          %s1527 = smul.addr %s1526, 8
          %s1528 = scalar_lea.vmem [#allocation7], %s1527
          %1529 = dma.done %s1525, 128
        $region116: #{mhp_fused_forward.1} parent=99 // pred_fallthru
          _
        // Predicated region
        $region117: #{mhp_fused_forward.1} parent=99 // pred_check
          %p1530 = pneg %p476
        $region118: #{mhp_fused_forward.1} parent=99 // pred_check_branch
          %1532 = sbr.rel (%p1530) target = $region120
        $region119: #{mhp_fused_forward.1} parent=99 // pred_region
          %p1533 = scmp.lt.s32.totalorder %s40, 1
          %s1534 = scalar_select %p1533, %s40, 1
          %s1535 = scalar_lea.vmem %s18, %s1534
        $region120: #{mhp_fused_forward.1} parent=99 // pred_fallthru
          _
      $region100: #{mhp_fused_forward.1} parent=5 // pred_fallthru
        _
    $region6: #{mhp_fused_forward.1} parent=1 // loop_footer
      %s38 = sadd.s32 1, %s34
    $region7: #{mhp_fused_forward.1} parent=1 // loop_footer_branch
      %33 = sbr.rel target = $region3
    $region8: #{mhp_fused_forward.1} parent=1 // loop_exit
      _
    %1536 = vsyncpa [#allocation3], 1
    %s1537 = scalar_lea.sflag [#allocation3], 1
    %1538 = vsyncpa %s1537, 1
    %1539 = vsyncpa [#allocation5], 1
    %s1540 = scalar_lea.sflag [#allocation5], 1
    %1541 = vsyncpa %s1540, 1
    %1542 = vsyncpa [#allocation8], 1
    %s1543 = scalar_lea.sflag [#allocation8], 1
    %1544 = vsyncpa %s1543, 1

</llo_original>
